<compile_context>
chip_gen: v5e
topology: v5e:2x2
jax: 0.10.0
libtpu: 0.0.40
codegen_flags: <defaults>
</compile_context>

<pallas_src>
import math
from functools import partial

import jax
import jax.numpy as jnp
from jax.experimental import pallas as pl
from jax.experimental.pallas import tpu as pltpu

_NORM_EPS = 1e-05
_NUM_LEVELS = 4
_NUM_BINS = sum(l * l for l in range(1, _NUM_LEVELS + 1))   # 30
_VMEM_LIMIT = 32 * 1024 * 1024       # explicit scoped-VMEM budget (safe on v7x 64 MiB)
_TILE_BYTES = 2 * 1024 * 1024        # ~2 MiB per x tile -> double-buffered in+out << limit


def _bin_edges(n, level):
    """torch AdaptiveMaxPool2d bin boundaries along one axis (static Python ints)."""
    return [((i * n) // level, ((i + 1) * n + level - 1) // level) for i in range(level)]


# ----------------------------------------------------------------------------
# Pass 1: fused per-channel sum / sum-of-squares + SPP max-pool bins
# ----------------------------------------------------------------------------
def _stats_spp_kernel(x_ref, stats_ref, spp_ref, *, row_tile, h, w):
    # x_ref    : (1, C, row_tile, W) tile of the NCHW input
    # stats_ref: (1, C, 2)   output-resident accumulator: [sum, sum_sq] per channel
    # spp_ref  : (1, C, 30)  output-resident accumulator: SPP max bins per channel
    t = pl.program_id(1)
    x = x_ref[0]                                                   # (C, TH, W)

    # per-tile first / second moments
    s = jnp.sum(jnp.sum(x, axis=2), axis=1, keepdims=True)         # (C, 1)
    ss = jnp.sum(jnp.sum(x * x, axis=2), axis=1, keepdims=True)    # (C, 1)
    stats_tile = jnp.concatenate([s, ss], axis=1)                  # (C, 2)

    # per-tile partial SPP maxes (levels 1..4); row-bin membership is masked with
    # the tile's global row ids, column bins are static lane slices.
    row_ids = t * row_tile + jax.lax.broadcasted_iota(jnp.int32, (1, row_tile), 1)
    neg_inf = jnp.float32(-jnp.inf)
    parts = []
    for level in range(1, _NUM_LEVELS + 1):
        col_bins = _bin_edges(w, level)
        row_bins = _bin_edges(h, level)
        # column-bin maxes per row, computed once per level: each (C, TH)
        colmax = [jnp.max(x[:, :, ws:we], axis=2) for (ws, we) in col_bins]
        for (hs, he) in row_bins:
            rmask = (row_ids >= hs) & (row_ids < he)               # (1, TH)
            for j in range(level):
                masked = jnp.where(rmask, colmax[j], neg_inf)      # (C, TH)
                parts.append(jnp.max(masked, axis=1, keepdims=True))   # (C, 1)
    spp_tile = jnp.concatenate(parts, axis=1)                      # (C, 30)

    @pl.when(t == 0)
    def _init():
        stats_ref[0] = stats_tile
        spp_ref[0] = spp_tile

    @pl.when(t > 0)
    def _accumulate():
        stats_ref[0] = stats_ref[0] + stats_tile
        spp_ref[0] = jnp.maximum(spp_ref[0], spp_tile)


def _stats_spp(x4, row_tile):
    B, C, H, W = x4.shape
    assert H % row_tile == 0
    nt = H // row_tile
    kern = partial(_stats_spp_kernel, row_tile=row_tile, h=H, w=W)
    return pl.pallas_call(
        kern,
        out_shape=(jax.ShapeDtypeStruct((B, C, 2), jnp.float32),
                   jax.ShapeDtypeStruct((B, C, _NUM_BINS), jnp.float32)),
        grid_spec=pltpu.PrefetchScalarGridSpec(
            num_scalar_prefetch=0,
            grid=(B, nt),
            in_specs=[pl.BlockSpec((1, C, row_tile, W), lambda b, t: (b, 0, t, 0))],
            out_specs=(pl.BlockSpec((1, C, 2), lambda b, t: (b, 0, 0)),
                       pl.BlockSpec((1, C, _NUM_BINS), lambda b, t: (b, 0, 0))),
        ),
        compiler_params=pltpu.CompilerParams(
            dimension_semantics=("parallel", "arbitrary"),
            vmem_limit_bytes=_VMEM_LIMIT),
    )(x4)


# ----------------------------------------------------------------------------
# Pass 2: lane-dense fused normalize + mixture affine  (o = x*scale + shift)
# ----------------------------------------------------------------------------
def _affine_kernel(x_ref, ss_ref, o_ref):
    # x_ref : (1, C, T)   tile of flattened input
    # ss_ref: (1, C, 2)   per-sample folded affine: [:, 0]=scale, [:, 1]=shift
    ss = ss_ref[0]                                 # (C, 2)
    scale = ss[:, 0:1]                             # (C, 1)
    shift = ss[:, 1:2]                             # (C, 1)
    o_ref[0] = x_ref[0] * scale + shift


def _apply_affine(x3, scale_shift, lane_tile):
    B, C, HW = x3.shape
    assert HW % lane_tile == 0
    nt = HW // lane_tile
    return pl.pallas_call(
        _affine_kernel,
        out_shape=jax.ShapeDtypeStruct((B, C, HW), jnp.float32),
        grid_spec=pltpu.PrefetchScalarGridSpec(
            num_scalar_prefetch=0,
            grid=(B, nt),
            in_specs=[pl.BlockSpec((1, C, lane_tile), lambda b, t: (b, 0, t)),
                      pl.BlockSpec((1, C, 2), lambda b, t: (b, 0, 0))],
            out_specs=pl.BlockSpec((1, C, lane_tile), lambda b, t: (b, 0, t)),
        ),
        compiler_params=pltpu.CompilerParams(
            dimension_semantics=("parallel", "parallel"),
            vmem_limit_bytes=_VMEM_LIMIT),
    )(x3, scale_shift)


# ----------------------------------------------------------------------------
# Tile-size heuristics (budget ~2 MiB of x per block)
# ----------------------------------------------------------------------------
def _pick_row_tile(H, C, W, max_bytes=_TILE_BYTES):
    cands = [th for th in range(8, H + 1, 8) if H % th == 0]
    if not cands:
        return H                                    # no mult-of-8 divisor: full H
    fitting = [th for th in cands if C * th * W * 4 <= max_bytes]
    return max(fitting) if fitting else min(cands)


def _pick_lane_tile(HW, C, max_bytes=_TILE_BYTES, max_lanes=4096):
    cands = [t for t in range(128, HW + 1, 128) if HW % t == 0]
    if not cands:
        return HW                                   # no mult-of-128 divisor: full HW
    fitting = [t for t in cands if t <= max_lanes and C * t * 4 <= max_bytes]
    return max(fitting) if fitting else min(cands)


# ----------------------------------------------------------------------------
# Full forward
# ----------------------------------------------------------------------------
def mixture_group_norm(x, params, num_groups, k, eps=_NORM_EPS,
                       row_tile=None, lane_tile=None):
    B, C, H, W = x.shape
    assert C % num_groups == 0
    cpg = C // num_groups
    HW = H * W
    xf = x.astype(jnp.float32)

    rt = row_tile if row_tile is not None else _pick_row_tile(H, C, W)
    lt = lane_tile if lane_tile is not None else _pick_lane_tile(HW, C)

    # ---- pass 1 (Pallas): single read of x -> stats + SPP bins ----
    stats, spp = _stats_spp(xf, rt)                     # (B,C,2), (B,C,30)

    # ---- tiny XLA glue: group stats + attention head + affine fold ----
    n = cpg * HW
    s_g = stats[:, :, 0].reshape(B, num_groups, cpg).sum(-1)
    ss_g = stats[:, :, 1].reshape(B, num_groups, cpg).sum(-1)
    mean_g = s_g / n
    var_g = jnp.maximum(ss_g / n - mean_g * mean_g, 0.0)    # clamp: E[x^2]-m^2 >= 0
    rstd_g = jax.lax.rsqrt(var_g + eps)
    mean_c = jnp.repeat(mean_g, cpg, axis=1)                # (B, C)
    rstd_c = jnp.repeat(rstd_g, cpg, axis=1)                # (B, C)

    # SPP feature vector in torch .view(B, -1) order (C-major within each level)
    feats, off = [], 0
    for level in range(1, _NUM_LEVELS + 1):
        feats.append(spp[:, :, off:off + level * level].reshape(B, C * level * level))
        off += level * level
    feat = jnp.concatenate(feats, axis=1)                   # (B, C*30)

    y = jax.nn.sigmoid(feat @ params["conv_w"].T + params["conv_b"])   # (B, k)
    w = y @ params["weight_"]                                # (B, C)
    b = y @ params["bias_"]                                  # (B, C)
    scale = rstd_c * w
    shift = b - mean_c * scale
    scale_shift = jnp.stack([scale, shift], axis=-1).astype(jnp.float32)   # (B, C, 2)

    # ---- pass 2 (Pallas): lane-dense normalize + affine ----
    out = _apply_affine(xf.reshape(B, C, HW), scale_shift, lt)
    return out.reshape(B, C, H, W)


# ----------------------------------------------------------------------------
# Pure-JAX reference (mirrors PyTorch forward exactly)
# ----------------------------------------------------------------------------
def _adaptive_max_pool2d_ref(x, level):
    B, C, H, W = x.shape
    rows = []
    for i in range(level):
        hs, he = (i * H) // level, ((i + 1) * H + level - 1) // level
        cols = []
        for j in range(level):
            ws, we = (j * W) // level, ((j + 1) * W + level - 1) // level
            cols.append(jnp.max(x[:, :, hs:he, ws:we], axis=(2, 3)))
        rows.append(jnp.stack(cols, axis=-1))
    return jnp.stack(rows, axis=-2)                          # (B, C, level, level)


def _spp_features_ref(x):
    B = x.shape[0]
    feats = []
    for level in range(1, _NUM_LEVELS + 1):
        feats.append(_adaptive_max_pool2d_ref(x, level).reshape(B, -1))
    return jnp.concatenate(feats, axis=1)


def mixture_group_norm_ref(x, params, num_groups, k, eps=_NORM_EPS):
    B, C, H, W = x.shape
    xg = x.reshape(B, num_groups, -1)
    mean = xg.mean(-1, keepdims=True)
    var = xg.var(-1, keepdims=True)
    xn = ((xg - mean) / jnp.sqrt(var + eps)).reshape(B, C, H, W)
    feat = _spp_features_ref(x)
    y = jax.nn.sigmoid(feat @ params["conv_w"].T + params["conv_b"])
    w = (y @ params["weight_"])[:, :, None, None]
    b = (y @ params["bias_"])[:, :, None, None]
    return w * xn + b


# ----------------------------------------------------------------------------
if __name__ == "__main__":
    def run_case(key, B, C, H, W, G, K, row_tile=None, lane_tile=None):
        att_in = C * _NUM_BINS
        k1, k2, k3, k4, k5 = jax.random.split(key, 5)
        bound = 1.0 / math.sqrt(att_in)
        params = {
            "weight_": 1.0 + 0.1 * jax.random.normal(k1, (K, C), jnp.float32),
            "bias_": 0.1 * jax.random.normal(k2, (K, C), jnp.float32),
            "conv_w": jax.random.uniform(k3, (K, att_in), jnp.float32, -bound, bound),
            "conv_b": jax.random.uniform(k4, (K,), jnp.float32, -bound, bound),
        }
        x = jax.random.normal(k5, (B, C, H, W), jnp.float32)
        out = jax.block_until_ready(
            mixture_group_norm(x, params, G, K, row_tile=row_tile, lane_tile=lane_tile))
        ref = mixture_group_norm_ref(x, params, G, K)
        assert out.shape == (B, C, H, W)
        assert jnp.allclose(out, ref, atol=1e-4, rtol=1e-4), "mismatch vs reference"

    key = jax.random.PRNGKey(0)
    ka, kb = jax.random.split(key)
    # auto-picked tiles (whole sample fits in one tile at this size)
    run_case(ka, B=2, C=8, H=32, W=32, G=2, K=4)
    # forced small tiles: exercises multi-tile stats/SPP accumulation (4 row tiles)
    # and the tiled normalize pass (4 lane tiles)
    run_case(kb, B=2, C=8, H=32, W=32, G=2, K=4, row_tile=8, lane_tile=256)

    print("KERNEL_OK")
</pallas_src>

<mosaic_0001>
module attributes {stable_mosaic.version = 11 : i64} {
  func.func @_stats_spp_kernel(%arg0: i32, %arg1: i32, %arg2: memref<1x8x32x32xf32, #tpu.memory_space<vmem>>, %arg3: memref<1x8x2xf32, #tpu.memory_space<vmem>>, %arg4: memref<1x8x30xf32, #tpu.memory_space<vmem>>) attributes {dimension_semantics = [#tpu.dimension_semantics<parallel>, #tpu.dimension_semantics<arbitrary>], iteration_bounds = array<i64: 2, 1>, scalar_prefetch = 0 : i64, scratch_operands = 0 : i64, tpu.core_type = #tpu.core_type<tc>, window_params = [{transform_indices = @transform_0, window_bounds = array<i64: 1, 8, 32, 32>}, {transform_indices = @transform_1, window_bounds = array<i64: 1, 8, 2>}, {transform_indices = @transform_2, window_bounds = array<i64: 1, 8, 30>}]} {
    %c0 = arith.constant 0 : index
    %c0_0 = arith.constant 0 : index
    %c0_1 = arith.constant 0 : index
    %c0_2 = arith.constant 0 : index
    %0 = vector.load %arg2[%c0, %c0_0, %c0_1, %c0_2] : memref<1x8x32x32xf32, #tpu.memory_space<vmem>>, vector<1x8x32x32xf32>
    %1 = vector.shape_cast %0 : vector<1x8x32x32xf32> to vector<8x32x32xf32>
    %cst = arith.constant dense<0.000000e+00> : vector<8x32xf32>
    %2 = vector.multi_reduction <add>, %1, %cst [2] : vector<8x32x32xf32> to vector<8x32xf32>
    %cst_3 = arith.constant dense<0.000000e+00> : vector<8xf32>
    %3 = vector.multi_reduction <add>, %2, %cst_3 [1] : vector<8x32xf32> to vector<8xf32>
    %4 = vector.shape_cast %3 : vector<8xf32> to vector<8x1xf32>
    %5 = arith.mulf %1, %1 : vector<8x32x32xf32>
    %cst_4 = arith.constant dense<0.000000e+00> : vector<8x32xf32>
    %6 = vector.multi_reduction <add>, %5, %cst_4 [2] : vector<8x32x32xf32> to vector<8x32xf32>
    %cst_5 = arith.constant dense<0.000000e+00> : vector<8xf32>
    %7 = vector.multi_reduction <add>, %6, %cst_5 [1] : vector<8x32xf32> to vector<8xf32>
    %8 = vector.shape_cast %7 : vector<8xf32> to vector<8x1xf32>
    %9 = tpu.concatenate %4, %8 in 1 : vector<8x1xf32>, vector<8x1xf32> -> vector<8x2xf32>
    %c32_i32 = arith.constant 32 : i32
    %10 = arith.muli %arg1, %c32_i32 : i32
    %11 = tpu.iota {dimensions = array<i32: 1>} : vector<1x32xi32>
    %12 = vector.broadcast %10 : i32 to vector<1x32xi32>
    %13 = arith.addi %12, %11 : vector<1x32xi32>
    %cst_6 = arith.constant dense<0xFF800000> : vector<8x32xf32>
    %14 = vector.multi_reduction <maximumf>, %1, %cst_6 [2] : vector<8x32x32xf32> to vector<8x32xf32>
    %c0_i32 = arith.constant 0 : i32
    %15 = vector.broadcast %c0_i32 : i32 to vector<1x32xi32>
    %16 = arith.cmpi sge, %13, %15 : vector<1x32xi32>
    %c32_i32_7 = arith.constant 32 : i32
    %17 = vector.broadcast %c32_i32_7 : i32 to vector<1x32xi32>
    %18 = arith.cmpi slt, %13, %17 : vector<1x32xi32>
    %19 = arith.andi %16, %18 : vector<1x32xi1>
    %cst_8 = arith.constant 0xFF800000 : f32
    %20 = vector.shape_cast %19 : vector<1x32xi1> to vector<1x32xi1>
    %21 = vector.broadcast %20 : vector<1x32xi1> to vector<8x32xi1>
    %22 = vector.broadcast %cst_8 : f32 to vector<8x32xf32>
    %23 = arith.select %21, %14, %22 : vector<8x32xi1>, vector<8x32xf32>
    %cst_9 = arith.constant dense<0xFF800000> : vector<8xf32>
    %24 = vector.multi_reduction <maximumf>, %23, %cst_9 [1] : vector<8x32xf32> to vector<8xf32>
    %25 = vector.shape_cast %24 : vector<8xf32> to vector<8x1xf32>
    %26 = vector.extract_strided_slice %1 {offsets = [0, 0, 0], sizes = [8, 32, 16], strides = [1, 1, 1]} : vector<8x32x32xf32> to vector<8x32x16xf32>
    %cst_10 = arith.constant dense<0xFF800000> : vector<8x32xf32>
    %27 = vector.multi_reduction <maximumf>, %26, %cst_10 [2] : vector<8x32x16xf32> to vector<8x32xf32>
    %28 = vector.extract_strided_slice %1 {offsets = [0, 0, 16], sizes = [8, 32, 16], strides = [1, 1, 1]} : vector<8x32x32xf32> to vector<8x32x16xf32>
    %cst_11 = arith.constant dense<0xFF800000> : vector<8x32xf32>
    %29 = vector.multi_reduction <maximumf>, %28, %cst_11 [2] : vector<8x32x16xf32> to vector<8x32xf32>
    %c0_i32_12 = arith.constant 0 : i32
    %30 = vector.broadcast %c0_i32_12 : i32 to vector<1x32xi32>
    %31 = arith.cmpi sge, %13, %30 : vector<1x32xi32>
    %c16_i32 = arith.constant 16 : i32
    %32 = vector.broadcast %c16_i32 : i32 to vector<1x32xi32>
    %33 = arith.cmpi slt, %13, %32 : vector<1x32xi32>
    %34 = arith.andi %31, %33 : vector<1x32xi1>
    %cst_13 = arith.constant 0xFF800000 : f32
    %35 = vector.shape_cast %34 : vector<1x32xi1> to vector<1x32xi1>
    %36 = vector.broadcast %35 : vector<1x32xi1> to vector<8x32xi1>
    %37 = vector.broadcast %cst_13 : f32 to vector<8x32xf32>
    %38 = arith.select %36, %27, %37 : vector<8x32xi1>, vector<8x32xf32>
    %cst_14 = arith.constant dense<0xFF800000> : vector<8xf32>
    %39 = vector.multi_reduction <maximumf>, %38, %cst_14 [1] : vector<8x32xf32> to vector<8xf32>
    %40 = vector.shape_cast %39 : vector<8xf32> to vector<8x1xf32>
    %cst_15 = arith.constant 0xFF800000 : f32
    %41 = vector.shape_cast %34 : vector<1x32xi1> to vector<1x32xi1>
    %42 = vector.broadcast %41 : vector<1x32xi1> to vector<8x32xi1>
    %43 = vector.broadcast %cst_15 : f32 to vector<8x32xf32>
    %44 = arith.select %42, %29, %43 : vector<8x32xi1>, vector<8x32xf32>
    %cst_16 = arith.constant dense<0xFF800000> : vector<8xf32>
    %45 = vector.multi_reduction <maximumf>, %44, %cst_16 [1] : vector<8x32xf32> to vector<8xf32>
    %46 = vector.shape_cast %45 : vector<8xf32> to vector<8x1xf32>
    %c16_i32_17 = arith.constant 16 : i32
    %47 = vector.broadcast %c16_i32_17 : i32 to vector<1x32xi32>
    %48 = arith.cmpi sge, %13, %47 : vector<1x32xi32>
    %c32_i32_18 = arith.constant 32 : i32
    %49 = vector.broadcast %c32_i32_18 : i32 to vector<1x32xi32>
    %50 = arith.cmpi slt, %13, %49 : vector<1x32xi32>
    %51 = arith.andi %48, %50 : vector<1x32xi1>
    %cst_19 = arith.constant 0xFF800000 : f32
    %52 = vector.shape_cast %51 : vector<1x32xi1> to vector<1x32xi1>
    %53 = vector.broadcast %52 : vector<1x32xi1> to vector<8x32xi1>
    %54 = vector.broadcast %cst_19 : f32 to vector<8x32xf32>
    %55 = arith.select %53, %27, %54 : vector<8x32xi1>, vector<8x32xf32>
    %cst_20 = arith.constant dense<0xFF800000> : vector<8xf32>
    %56 = vector.multi_reduction <maximumf>, %55, %cst_20 [1] : vector<8x32xf32> to vector<8xf32>
    %57 = vector.shape_cast %56 : vector<8xf32> to vector<8x1xf32>
    %cst_21 = arith.constant 0xFF800000 : f32
    %58 = vector.shape_cast %51 : vector<1x32xi1> to vector<1x32xi1>
    %59 = vector.broadcast %58 : vector<1x32xi1> to vector<8x32xi1>
    %60 = vector.broadcast %cst_21 : f32 to vector<8x32xf32>
    %61 = arith.select %59, %29, %60 : vector<8x32xi1>, vector<8x32xf32>
    %cst_22 = arith.constant dense<0xFF800000> : vector<8xf32>
    %62 = vector.multi_reduction <maximumf>, %61, %cst_22 [1] : vector<8x32xf32> to vector<8xf32>
    %63 = vector.shape_cast %62 : vector<8xf32> to vector<8x1xf32>
    %64 = vector.extract_strided_slice %1 {offsets = [0, 0, 0], sizes = [8, 32, 11], strides = [1, 1, 1]} : vector<8x32x32xf32> to vector<8x32x11xf32>
    %cst_23 = arith.constant dense<0xFF800000> : vector<8x32xf32>
    %65 = vector.multi_reduction <maximumf>, %64, %cst_23 [2] : vector<8x32x11xf32> to vector<8x32xf32>
    %66 = vector.extract_strided_slice %1 {offsets = [0, 0, 10], sizes = [8, 32, 12], strides = [1, 1, 1]} : vector<8x32x32xf32> to vector<8x32x12xf32>
    %cst_24 = arith.constant dense<0xFF800000> : vector<8x32xf32>
    %67 = vector.multi_reduction <maximumf>, %66, %cst_24 [2] : vector<8x32x12xf32> to vector<8x32xf32>
    %68 = vector.extract_strided_slice %1 {offsets = [0, 0, 21], sizes = [8, 32, 11], strides = [1, 1, 1]} : vector<8x32x32xf32> to vector<8x32x11xf32>
    %cst_25 = arith.constant dense<0xFF800000> : vector<8x32xf32>
    %69 = vector.multi_reduction <maximumf>, %68, %cst_25 [2] : vector<8x32x11xf32> to vector<8x32xf32>
    %c0_i32_26 = arith.constant 0 : i32
    %70 = vector.broadcast %c0_i32_26 : i32 to vector<1x32xi32>
    %71 = arith.cmpi sge, %13, %70 : vector<1x32xi32>
    %c11_i32 = arith.constant 11 : i32
    %72 = vector.broadcast %c11_i32 : i32 to vector<1x32xi32>
    %73 = arith.cmpi slt, %13, %72 : vector<1x32xi32>
    %74 = arith.andi %71, %73 : vector<1x32xi1>
    %cst_27 = arith.constant 0xFF800000 : f32
    %75 = vector.shape_cast %74 : vector<1x32xi1> to vector<1x32xi1>
    %76 = vector.broadcast %75 : vector<1x32xi1> to vector<8x32xi1>
    %77 = vector.broadcast %cst_27 : f32 to vector<8x32xf32>
    %78 = arith.select %76, %65, %77 : vector<8x32xi1>, vector<8x32xf32>
    %cst_28 = arith.constant dense<0xFF800000> : vector<8xf32>
    %79 = vector.multi_reduction <maximumf>, %78, %cst_28 [1] : vector<8x32xf32> to vector<8xf32>
    %80 = vector.shape_cast %79 : vector<8xf32> to vector<8x1xf32>
    %cst_29 = arith.constant 0xFF800000 : f32
    %81 = vector.shape_cast %74 : vector<1x32xi1> to vector<1x32xi1>
    %82 = vector.broadcast %81 : vector<1x32xi1> to vector<8x32xi1>
    %83 = vector.broadcast %cst_29 : f32 to vector<8x32xf32>
    %84 = arith.select %82, %67, %83 : vector<8x32xi1>, vector<8x32xf32>
    %cst_30 = arith.constant dense<0xFF800000> : vector<8xf32>
    %85 = vector.multi_reduction <maximumf>, %84, %cst_30 [1] : vector<8x32xf32> to vector<8xf32>
    %86 = vector.shape_cast %85 : vector<8xf32> to vector<8x1xf32>
    %cst_31 = arith.constant 0xFF800000 : f32
    %87 = vector.shape_cast %74 : vector<1x32xi1> to vector<1x32xi1>
    %88 = vector.broadcast %87 : vector<1x32xi1> to vector<8x32xi1>
    %89 = vector.broadcast %cst_31 : f32 to vector<8x32xf32>
    %90 = arith.select %88, %69, %89 : vector<8x32xi1>, vector<8x32xf32>
    %cst_32 = arith.constant dense<0xFF800000> : vector<8xf32>
    %91 = vector.multi_reduction <maximumf>, %90, %cst_32 [1] : vector<8x32xf32> to vector<8xf32>
    %92 = vector.shape_cast %91 : vector<8xf32> to vector<8x1xf32>
    %c10_i32 = arith.constant 10 : i32
    %93 = vector.broadcast %c10_i32 : i32 to vector<1x32xi32>
    %94 = arith.cmpi sge, %13, %93 : vector<1x32xi32>
    %c22_i32 = arith.constant 22 : i32
    %95 = vector.broadcast %c22_i32 : i32 to vector<1x32xi32>
    %96 = arith.cmpi slt, %13, %95 : vector<1x32xi32>
    %97 = arith.andi %94, %96 : vector<1x32xi1>
    %cst_33 = arith.constant 0xFF800000 : f32
    %98 = vector.shape_cast %97 : vector<1x32xi1> to vector<1x32xi1>
    %99 = vector.broadcast %98 : vector<1x32xi1> to vector<8x32xi1>
    %100 = vector.broadcast %cst_33 : f32 to vector<8x32xf32>
    %101 = arith.select %99, %65, %100 : vector<8x32xi1>, vector<8x32xf32>
    %cst_34 = arith.constant dense<0xFF800000> : vector<8xf32>
    %102 = vector.multi_reduction <maximumf>, %101, %cst_34 [1] : vector<8x32xf32> to vector<8xf32>
    %103 = vector.shape_cast %102 : vector<8xf32> to vector<8x1xf32>
    %cst_35 = arith.constant 0xFF800000 : f32
    %104 = vector.shape_cast %97 : vector<1x32xi1> to vector<1x32xi1>
    %105 = vector.broadcast %104 : vector<1x32xi1> to vector<8x32xi1>
    %106 = vector.broadcast %cst_35 : f32 to vector<8x32xf32>
    %107 = arith.select %105, %67, %106 : vector<8x32xi1>, vector<8x32xf32>
    %cst_36 = arith.constant dense<0xFF800000> : vector<8xf32>
    %108 = vector.multi_reduction <maximumf>, %107, %cst_36 [1] : vector<8x32xf32> to vector<8xf32>
    %109 = vector.shape_cast %108 : vector<8xf32> to vector<8x1xf32>
    %cst_37 = arith.constant 0xFF800000 : f32
    %110 = vector.shape_cast %97 : vector<1x32xi1> to vector<1x32xi1>
    %111 = vector.broadcast %110 : vector<1x32xi1> to vector<8x32xi1>
    %112 = vector.broadcast %cst_37 : f32 to vector<8x32xf32>
    %113 = arith.select %111, %69, %112 : vector<8x32xi1>, vector<8x32xf32>
    %cst_38 = arith.constant dense<0xFF800000> : vector<8xf32>
    %114 = vector.multi_reduction <maximumf>, %113, %cst_38 [1] : vector<8x32xf32> to vector<8xf32>
    %115 = vector.shape_cast %114 : vector<8xf32> to vector<8x1xf32>
    %c21_i32 = arith.constant 21 : i32
    %116 = vector.broadcast %c21_i32 : i32 to vector<1x32xi32>
    %117 = arith.cmpi sge, %13, %116 : vector<1x32xi32>
    %c32_i32_39 = arith.constant 32 : i32
    %118 = vector.broadcast %c32_i32_39 : i32 to vector<1x32xi32>
    %119 = arith.cmpi slt, %13, %118 : vector<1x32xi32>
    %120 = arith.andi %117, %119 : vector<1x32xi1>
    %cst_40 = arith.constant 0xFF800000 : f32
    %121 = vector.shape_cast %120 : vector<1x32xi1> to vector<1x32xi1>
    %122 = vector.broadcast %121 : vector<1x32xi1> to vector<8x32xi1>
    %123 = vector.broadcast %cst_40 : f32 to vector<8x32xf32>
    %124 = arith.select %122, %65, %123 : vector<8x32xi1>, vector<8x32xf32>
    %cst_41 = arith.constant dense<0xFF800000> : vector<8xf32>
    %125 = vector.multi_reduction <maximumf>, %124, %cst_41 [1] : vector<8x32xf32> to vector<8xf32>
    %126 = vector.shape_cast %125 : vector<8xf32> to vector<8x1xf32>
    %cst_42 = arith.constant 0xFF800000 : f32
    %127 = vector.shape_cast %120 : vector<1x32xi1> to vector<1x32xi1>
    %128 = vector.broadcast %127 : vector<1x32xi1> to vector<8x32xi1>
    %129 = vector.broadcast %cst_42 : f32 to vector<8x32xf32>
    %130 = arith.select %128, %67, %129 : vector<8x32xi1>, vector<8x32xf32>
    %cst_43 = arith.constant dense<0xFF800000> : vector<8xf32>
    %131 = vector.multi_reduction <maximumf>, %130, %cst_43 [1] : vector<8x32xf32> to vector<8xf32>
    %132 = vector.shape_cast %131 : vector<8xf32> to vector<8x1xf32>
    %cst_44 = arith.constant 0xFF800000 : f32
    %133 = vector.shape_cast %120 : vector<1x32xi1> to vector<1x32xi1>
    %134 = vector.broadcast %133 : vector<1x32xi1> to vector<8x32xi1>
    %135 = vector.broadcast %cst_44 : f32 to vector<8x32xf32>
    %136 = arith.select %134, %69, %135 : vector<8x32xi1>, vector<8x32xf32>
    %cst_45 = arith.constant dense<0xFF800000> : vector<8xf32>
    %137 = vector.multi_reduction <maximumf>, %136, %cst_45 [1] : vector<8x32xf32> to vector<8xf32>
    %138 = vector.shape_cast %137 : vector<8xf32> to vector<8x1xf32>
    %139 = vector.extract_strided_slice %1 {offsets = [0, 0, 0], sizes = [8, 32, 8], strides = [1, 1, 1]} : vector<8x32x32xf32> to vector<8x32x8xf32>
    %cst_46 = arith.constant dense<0xFF800000> : vector<8x32xf32>
    %140 = vector.multi_reduction <maximumf>, %139, %cst_46 [2] : vector<8x32x8xf32> to vector<8x32xf32>
    %141 = vector.extract_strided_slice %1 {offsets = [0, 0, 8], sizes = [8, 32, 8], strides = [1, 1, 1]} : vector<8x32x32xf32> to vector<8x32x8xf32>
    %cst_47 = arith.constant dense<0xFF800000> : vector<8x32xf32>
    %142 = vector.multi_reduction <maximumf>, %141, %cst_47 [2] : vector<8x32x8xf32> to vector<8x32xf32>
    %143 = vector.extract_strided_slice %1 {offsets = [0, 0, 16], sizes = [8, 32, 8], strides = [1, 1, 1]} : vector<8x32x32xf32> to vector<8x32x8xf32>
    %cst_48 = arith.constant dense<0xFF800000> : vector<8x32xf32>
    %144 = vector.multi_reduction <maximumf>, %143, %cst_48 [2] : vector<8x32x8xf32> to vector<8x32xf32>
    %145 = vector.extract_strided_slice %1 {offsets = [0, 0, 24], sizes = [8, 32, 8], strides = [1, 1, 1]} : vector<8x32x32xf32> to vector<8x32x8xf32>
    %cst_49 = arith.constant dense<0xFF800000> : vector<8x32xf32>
    %146 = vector.multi_reduction <maximumf>, %145, %cst_49 [2] : vector<8x32x8xf32> to vector<8x32xf32>
    %c0_i32_50 = arith.constant 0 : i32
    %147 = vector.broadcast %c0_i32_50 : i32 to vector<1x32xi32>
    %148 = arith.cmpi sge, %13, %147 : vector<1x32xi32>
    %c8_i32 = arith.constant 8 : i32
    %149 = vector.broadcast %c8_i32 : i32 to vector<1x32xi32>
    %150 = arith.cmpi slt, %13, %149 : vector<1x32xi32>
    %151 = arith.andi %148, %150 : vector<1x32xi1>
    %cst_51 = arith.constant 0xFF800000 : f32
    %152 = vector.shape_cast %151 : vector<1x32xi1> to vector<1x32xi1>
    %153 = vector.broadcast %152 : vector<1x32xi1> to vector<8x32xi1>
    %154 = vector.broadcast %cst_51 : f32 to vector<8x32xf32>
    %155 = arith.select %153, %140, %154 : vector<8x32xi1>, vector<8x32xf32>
    %cst_52 = arith.constant dense<0xFF800000> : vector<8xf32>
    %156 = vector.multi_reduction <maximumf>, %155, %cst_52 [1] : vector<8x32xf32> to vector<8xf32>
    %157 = vector.shape_cast %156 : vector<8xf32> to vector<8x1xf32>
    %cst_53 = arith.constant 0xFF800000 : f32
    %158 = vector.shape_cast %151 : vector<1x32xi1> to vector<1x32xi1>
    %159 = vector.broadcast %158 : vector<1x32xi1> to vector<8x32xi1>
    %160 = vector.broadcast %cst_53 : f32 to vector<8x32xf32>
    %161 = arith.select %159, %142, %160 : vector<8x32xi1>, vector<8x32xf32>
    %cst_54 = arith.constant dense<0xFF800000> : vector<8xf32>
    %162 = vector.multi_reduction <maximumf>, %161, %cst_54 [1] : vector<8x32xf32> to vector<8xf32>
    %163 = vector.shape_cast %162 : vector<8xf32> to vector<8x1xf32>
    %cst_55 = arith.constant 0xFF800000 : f32
    %164 = vector.shape_cast %151 : vector<1x32xi1> to vector<1x32xi1>
    %165 = vector.broadcast %164 : vector<1x32xi1> to vector<8x32xi1>
    %166 = vector.broadcast %cst_55 : f32 to vector<8x32xf32>
    %167 = arith.select %165, %144, %166 : vector<8x32xi1>, vector<8x32xf32>
    %cst_56 = arith.constant dense<0xFF800000> : vector<8xf32>
    %168 = vector.multi_reduction <maximumf>, %167, %cst_56 [1] : vector<8x32xf32> to vector<8xf32>
    %169 = vector.shape_cast %168 : vector<8xf32> to vector<8x1xf32>
    %cst_57 = arith.constant 0xFF800000 : f32
    %170 = vector.shape_cast %151 : vector<1x32xi1> to vector<1x32xi1>
    %171 = vector.broadcast %170 : vector<1x32xi1> to vector<8x32xi1>
    %172 = vector.broadcast %cst_57 : f32 to vector<8x32xf32>
    %173 = arith.select %171, %146, %172 : vector<8x32xi1>, vector<8x32xf32>
    %cst_58 = arith.constant dense<0xFF800000> : vector<8xf32>
    %174 = vector.multi_reduction <maximumf>, %173, %cst_58 [1] : vector<8x32xf32> to vector<8xf32>
    %175 = vector.shape_cast %174 : vector<8xf32> to vector<8x1xf32>
    %c8_i32_59 = arith.constant 8 : i32
    %176 = vector.broadcast %c8_i32_59 : i32 to vector<1x32xi32>
    %177 = arith.cmpi sge, %13, %176 : vector<1x32xi32>
    %c16_i32_60 = arith.constant 16 : i32
    %178 = vector.broadcast %c16_i32_60 : i32 to vector<1x32xi32>
    %179 = arith.cmpi slt, %13, %178 : vector<1x32xi32>
    %180 = arith.andi %177, %179 : vector<1x32xi1>
    %cst_61 = arith.constant 0xFF800000 : f32
    %181 = vector.shape_cast %180 : vector<1x32xi1> to vector<1x32xi1>
    %182 = vector.broadcast %181 : vector<1x32xi1> to vector<8x32xi1>
    %183 = vector.broadcast %cst_61 : f32 to vector<8x32xf32>
    %184 = arith.select %182, %140, %183 : vector<8x32xi1>, vector<8x32xf32>
    %cst_62 = arith.constant dense<0xFF800000> : vector<8xf32>
    %185 = vector.multi_reduction <maximumf>, %184, %cst_62 [1] : vector<8x32xf32> to vector<8xf32>
    %186 = vector.shape_cast %185 : vector<8xf32> to vector<8x1xf32>
    %cst_63 = arith.constant 0xFF800000 : f32
    %187 = vector.shape_cast %180 : vector<1x32xi1> to vector<1x32xi1>
    %188 = vector.broadcast %187 : vector<1x32xi1> to vector<8x32xi1>
    %189 = vector.broadcast %cst_63 : f32 to vector<8x32xf32>
    %190 = arith.select %188, %142, %189 : vector<8x32xi1>, vector<8x32xf32>
    %cst_64 = arith.constant dense<0xFF800000> : vector<8xf32>
    %191 = vector.multi_reduction <maximumf>, %190, %cst_64 [1] : vector<8x32xf32> to vector<8xf32>
    %192 = vector.shape_cast %191 : vector<8xf32> to vector<8x1xf32>
    %cst_65 = arith.constant 0xFF800000 : f32
    %193 = vector.shape_cast %180 : vector<1x32xi1> to vector<1x32xi1>
    %194 = vector.broadcast %193 : vector<1x32xi1> to vector<8x32xi1>
    %195 = vector.broadcast %cst_65 : f32 to vector<8x32xf32>
    %196 = arith.select %194, %144, %195 : vector<8x32xi1>, vector<8x32xf32>
    %cst_66 = arith.constant dense<0xFF800000> : vector<8xf32>
    %197 = vector.multi_reduction <maximumf>, %196, %cst_66 [1] : vector<8x32xf32> to vector<8xf32>
    %198 = vector.shape_cast %197 : vector<8xf32> to vector<8x1xf32>
    %cst_67 = arith.constant 0xFF800000 : f32
    %199 = vector.shape_cast %180 : vector<1x32xi1> to vector<1x32xi1>
    %200 = vector.broadcast %199 : vector<1x32xi1> to vector<8x32xi1>
    %201 = vector.broadcast %cst_67 : f32 to vector<8x32xf32>
    %202 = arith.select %200, %146, %201 : vector<8x32xi1>, vector<8x32xf32>
    %cst_68 = arith.constant dense<0xFF800000> : vector<8xf32>
    %203 = vector.multi_reduction <maximumf>, %202, %cst_68 [1] : vector<8x32xf32> to vector<8xf32>
    %204 = vector.shape_cast %203 : vector<8xf32> to vector<8x1xf32>
    %c16_i32_69 = arith.constant 16 : i32
    %205 = vector.broadcast %c16_i32_69 : i32 to vector<1x32xi32>
    %206 = arith.cmpi sge, %13, %205 : vector<1x32xi32>
    %c24_i32 = arith.constant 24 : i32
    %207 = vector.broadcast %c24_i32 : i32 to vector<1x32xi32>
    %208 = arith.cmpi slt, %13, %207 : vector<1x32xi32>
    %209 = arith.andi %206, %208 : vector<1x32xi1>
    %cst_70 = arith.constant 0xFF800000 : f32
    %210 = vector.shape_cast %209 : vector<1x32xi1> to vector<1x32xi1>
    %211 = vector.broadcast %210 : vector<1x32xi1> to vector<8x32xi1>
    %212 = vector.broadcast %cst_70 : f32 to vector<8x32xf32>
    %213 = arith.select %211, %140, %212 : vector<8x32xi1>, vector<8x32xf32>
    %cst_71 = arith.constant dense<0xFF800000> : vector<8xf32>
    %214 = vector.multi_reduction <maximumf>, %213, %cst_71 [1] : vector<8x32xf32> to vector<8xf32>
    %215 = vector.shape_cast %214 : vector<8xf32> to vector<8x1xf32>
    %cst_72 = arith.constant 0xFF800000 : f32
    %216 = vector.shape_cast %209 : vector<1x32xi1> to vector<1x32xi1>
    %217 = vector.broadcast %216 : vector<1x32xi1> to vector<8x32xi1>
    %218 = vector.broadcast %cst_72 : f32 to vector<8x32xf32>
    %219 = arith.select %217, %142, %218 : vector<8x32xi1>, vector<8x32xf32>
    %cst_73 = arith.constant dense<0xFF800000> : vector<8xf32>
    %220 = vector.multi_reduction <maximumf>, %219, %cst_73 [1] : vector<8x32xf32> to vector<8xf32>
    %221 = vector.shape_cast %220 : vector<8xf32> to vector<8x1xf32>
    %cst_74 = arith.constant 0xFF800000 : f32
    %222 = vector.shape_cast %209 : vector<1x32xi1> to vector<1x32xi1>
    %223 = vector.broadcast %222 : vector<1x32xi1> to vector<8x32xi1>
    %224 = vector.broadcast %cst_74 : f32 to vector<8x32xf32>
    %225 = arith.select %223, %144, %224 : vector<8x32xi1>, vector<8x32xf32>
    %cst_75 = arith.constant dense<0xFF800000> : vector<8xf32>
    %226 = vector.multi_reduction <maximumf>, %225, %cst_75 [1] : vector<8x32xf32> to vector<8xf32>
    %227 = vector.shape_cast %226 : vector<8xf32> to vector<8x1xf32>
    %cst_76 = arith.constant 0xFF800000 : f32
    %228 = vector.shape_cast %209 : vector<1x32xi1> to vector<1x32xi1>
    %229 = vector.broadcast %228 : vector<1x32xi1> to vector<8x32xi1>
    %230 = vector.broadcast %cst_76 : f32 to vector<8x32xf32>
    %231 = arith.select %229, %146, %230 : vector<8x32xi1>, vector<8x32xf32>
    %cst_77 = arith.constant dense<0xFF800000> : vector<8xf32>
    %232 = vector.multi_reduction <maximumf>, %231, %cst_77 [1] : vector<8x32xf32> to vector<8xf32>
    %233 = vector.shape_cast %232 : vector<8xf32> to vector<8x1xf32>
    %c24_i32_78 = arith.constant 24 : i32
    %234 = vector.broadcast %c24_i32_78 : i32 to vector<1x32xi32>
    %235 = arith.cmpi sge, %13, %234 : vector<1x32xi32>
    %c32_i32_79 = arith.constant 32 : i32
    %236 = vector.broadcast %c32_i32_79 : i32 to vector<1x32xi32>
    %237 = arith.cmpi slt, %13, %236 : vector<1x32xi32>
    %238 = arith.andi %235, %237 : vector<1x32xi1>
    %cst_80 = arith.constant 0xFF800000 : f32
    %239 = vector.shape_cast %238 : vector<1x32xi1> to vector<1x32xi1>
    %240 = vector.broadcast %239 : vector<1x32xi1> to vector<8x32xi1>
    %241 = vector.broadcast %cst_80 : f32 to vector<8x32xf32>
    %242 = arith.select %240, %140, %241 : vector<8x32xi1>, vector<8x32xf32>
    %cst_81 = arith.constant dense<0xFF800000> : vector<8xf32>
    %243 = vector.multi_reduction <maximumf>, %242, %cst_81 [1] : vector<8x32xf32> to vector<8xf32>
    %244 = vector.shape_cast %243 : vector<8xf32> to vector<8x1xf32>
    %cst_82 = arith.constant 0xFF800000 : f32
    %245 = vector.shape_cast %238 : vector<1x32xi1> to vector<1x32xi1>
    %246 = vector.broadcast %245 : vector<1x32xi1> to vector<8x32xi1>
    %247 = vector.broadcast %cst_82 : f32 to vector<8x32xf32>
    %248 = arith.select %246, %142, %247 : vector<8x32xi1>, vector<8x32xf32>
    %cst_83 = arith.constant dense<0xFF800000> : vector<8xf32>
    %249 = vector.multi_reduction <maximumf>, %248, %cst_83 [1] : vector<8x32xf32> to vector<8xf32>
    %250 = vector.shape_cast %249 : vector<8xf32> to vector<8x1xf32>
    %cst_84 = arith.constant 0xFF800000 : f32
    %251 = vector.shape_cast %238 : vector<1x32xi1> to vector<1x32xi1>
    %252 = vector.broadcast %251 : vector<1x32xi1> to vector<8x32xi1>
    %253 = vector.broadcast %cst_84 : f32 to vector<8x32xf32>
    %254 = arith.select %252, %144, %253 : vector<8x32xi1>, vector<8x32xf32>
    %cst_85 = arith.constant dense<0xFF800000> : vector<8xf32>
    %255 = vector.multi_reduction <maximumf>, %254, %cst_85 [1] : vector<8x32xf32> to vector<8xf32>
    %256 = vector.shape_cast %255 : vector<8xf32> to vector<8x1xf32>
    %cst_86 = arith.constant 0xFF800000 : f32
    %257 = vector.shape_cast %238 : vector<1x32xi1> to vector<1x32xi1>
    %258 = vector.broadcast %257 : vector<1x32xi1> to vector<8x32xi1>
    %259 = vector.broadcast %cst_86 : f32 to vector<8x32xf32>
    %260 = arith.select %258, %146, %259 : vector<8x32xi1>, vector<8x32xf32>
    %cst_87 = arith.constant dense<0xFF800000> : vector<8xf32>
    %261 = vector.multi_reduction <maximumf>, %260, %cst_87 [1] : vector<8x32xf32> to vector<8xf32>
    %262 = vector.shape_cast %261 : vector<8xf32> to vector<8x1xf32>
    %263 = tpu.concatenate %25, %40, %46, %57, %63, %80, %86, %92, %103, %109, %115, %126, %132, %138, %157, %163 in 1 : vector<8x1xf32>, vector<8x1xf32>, vector<8x1xf32>, vector<8x1xf32>, vector<8x1xf32>, vector<8x1xf32>, vector<8x1xf32>, vector<8x1xf32>, vector<8x1xf32>, vector<8x1xf32>, vector<8x1xf32>, vector<8x1xf32>, vector<8x1xf32>, vector<8x1xf32>, vector<8x1xf32>, vector<8x1xf32> -> vector<8x16xf32>
    %264 = tpu.concatenate %169, %175, %186, %192, %198, %204, %215, %221, %227, %233, %244, %250, %256, %262 in 1 : vector<8x1xf32>, vector<8x1xf32>, vector<8x1xf32>, vector<8x1xf32>, vector<8x1xf32>, vector<8x1xf32>, vector<8x1xf32>, vector<8x1xf32>, vector<8x1xf32>, vector<8x1xf32>, vector<8x1xf32>, vector<8x1xf32>, vector<8x1xf32>, vector<8x1xf32> -> vector<8x14xf32>
    %265 = tpu.concatenate %263, %264 in 1 : vector<8x16xf32>, vector<8x14xf32> -> vector<8x30xf32>
    %c0_i32_88 = arith.constant 0 : i32
    %266 = arith.cmpi eq, %arg1, %c0_i32_88 : i32
    %267 = arith.extui %266 : i1 to i32
    %c0_i32_89 = arith.constant 0 : i32
    %268 = arith.cmpi ne, %267, %c0_i32_89 : i32
    scf.if %268 {
      %c0_92 = arith.constant 0 : index
      %c0_93 = arith.constant 0 : index
      %c0_94 = arith.constant 0 : index
      %272 = vector.load %arg3[%c0_92, %c0_93, %c0_94] : memref<1x8x2xf32, #tpu.memory_space<vmem>>, vector<1x8x2xf32>
      %273 = vector.shape_cast %272 : vector<1x8x2xf32> to vector<8x2xf32>
      %274 = vector.shape_cast %9 : vector<8x2xf32> to vector<1x8x2xf32>
      tpu.vector_store %arg3[%c0_92, %c0_93, %c0_94], %274 {strides = array<i32>} : memref<1x8x2xf32, #tpu.memory_space<vmem>>, vector<1x8x2xf32>,
      %c0_95 = arith.constant 0 : index
      %c0_96 = arith.constant 0 : index
      %c0_97 = arith.constant 0 : index
      %275 = vector.load %arg4[%c0_95, %c0_96, %c0_97] : memref<1x8x30xf32, #tpu.memory_space<vmem>>, vector<1x8x30xf32>
      %276 = vector.shape_cast %275 : vector<1x8x30xf32> to vector<8x30xf32>
      %277 = vector.shape_cast %265 : vector<8x30xf32> to vector<1x8x30xf32>
      tpu.vector_store %arg4[%c0_95, %c0_96, %c0_97], %277 {strides = array<i32>} : memref<1x8x30xf32, #tpu.memory_space<vmem>>, vector<1x8x30xf32>,
    } else {
    }
    %c0_i32_90 = arith.constant 0 : i32
    %269 = arith.cmpi sgt, %arg1, %c0_i32_90 : i32
    %270 = arith.extui %269 : i1 to i32
    %c0_i32_91 = arith.constant 0 : i32
    %271 = arith.cmpi ne, %270, %c0_i32_91 : i32
    scf.if %271 {
      %c0_92 = arith.constant 0 : index
      %c0_93 = arith.constant 0 : index
      %c0_94 = arith.constant 0 : index
      %272 = vector.load %arg3[%c0_92, %c0_93, %c0_94] : memref<1x8x2xf32, #tpu.memory_space<vmem>>, vector<1x8x2xf32>
      %273 = vector.shape_cast %272 : vector<1x8x2xf32> to vector<8x2xf32>
      %274 = arith.addf %273, %9 : vector<8x2xf32>
      %c0_95 = arith.constant 0 : index
      %c0_96 = arith.constant 0 : index
      %c0_97 = arith.constant 0 : index
      %275 = vector.load %arg3[%c0_95, %c0_96, %c0_97] : memref<1x8x2xf32, #tpu.memory_space<vmem>>, vector<1x8x2xf32>
      %276 = vector.shape_cast %275 : vector<1x8x2xf32> to vector<8x2xf32>
      %277 = vector.shape_cast %274 : vector<8x2xf32> to vector<1x8x2xf32>
      tpu.vector_store %arg3[%c0_95, %c0_96, %c0_97], %277 {strides = array<i32>} : memref<1x8x2xf32, #tpu.memory_space<vmem>>, vector<1x8x2xf32>,
      %c0_98 = arith.constant 0 : index
      %c0_99 = arith.constant 0 : index
      %c0_100 = arith.constant 0 : index
      %278 = vector.load %arg4[%c0_98, %c0_99, %c0_100] : memref<1x8x30xf32, #tpu.memory_space<vmem>>, vector<1x8x30xf32>
      %279 = vector.shape_cast %278 : vector<1x8x30xf32> to vector<8x30xf32>
      %280 = arith.maximumf %279, %265 : vector<8x30xf32>
      %c0_101 = arith.constant 0 : index
      %c0_102 = arith.constant 0 : index
      %c0_103 = arith.constant 0 : index
      %281 = vector.load %arg4[%c0_101, %c0_102, %c0_103] : memref<1x8x30xf32, #tpu.memory_space<vmem>>, vector<1x8x30xf32>
      %282 = vector.shape_cast %281 : vector<1x8x30xf32> to vector<8x30xf32>
      %283 = vector.shape_cast %280 : vector<8x30xf32> to vector<1x8x30xf32>
      tpu.vector_store %arg4[%c0_101, %c0_102, %c0_103], %283 {strides = array<i32>} : memref<1x8x30xf32, #tpu.memory_space<vmem>>, vector<1x8x30xf32>,
    } else {
    }
    return
  }
  func.func @transform_0(%arg0: i32, %arg1: i32) -> (i32, i32, i32, i32) {
    %c0_i32 = arith.constant 0 : i32
    %c0_i32_0 = arith.constant 0 : i32
    %c0_i32_1 = arith.constant 0 : i32
    return %arg0, %c0_i32, %arg1, %c0_i32_0 : i32, i32, i32, i32
  }
  func.func @transform_1(%arg0: i32, %arg1: i32) -> (i32, i32, i32) {
    %c0_i32 = arith.constant 0 : i32
    %c0_i32_0 = arith.constant 0 : i32
    %c0_i32_1 = arith.constant 0 : i32
    return %arg0, %c0_i32, %c0_i32_0 : i32, i32, i32
  }
  func.func @transform_2(%arg0: i32, %arg1: i32) -> (i32, i32, i32) {
    %c0_i32 = arith.constant 0 : i32
    %c0_i32_0 = arith.constant 0 : i32
    %c0_i32_1 = arith.constant 0 : i32
    return %arg0, %c0_i32, %c0_i32_0 : i32, i32, i32
  }
}

</mosaic_0001>

<llo_original>
// kernel: tpu_custom_call.1
$region0: #{tpu_custom_call.1}
  #allocation0 [shape = 'u32[]', space=smem, size = 0x4, offset = 0x4, fixed_abs, tag = 'smem constant byte address 0x4 - core index']
  #allocation1 [shape = 'u32[72,128]{1,0:T(1,128)}', space=vmem, size = 0x9000, scoped, tag = 'internal scratch']
  %s0 = inlined_call_operand.hbm [shape: f32[2,8,32,32], index: 0, kind: input, shape index: {}]
  %s1 = inlined_call_operand.vmem [shape: f32[2,8,2], index: 1, kind: output, shape index: {0}]
  %s2 = inlined_call_operand.hbm [shape: f32[2,8,30], index: 2, kind: output, shape index: {1}]
  %3 = xla_tuple %s1, %s2
  %s4 = sld [smem:[#allocation0]]
  $region57: #{tpu_custom_call.1} parent=0
    _
  %s6 = ssub.s32 1, %s4
  %s7 = scalar_select 0, %s6, %s4
  $region1: #{tpu_custom_call.1} parent=0
    #allocation2 [shape = 'u8[262144]{0}', space=vmem, size = 0x40000, scoped, tag = 'input window, operand 0']
    #allocation3 [shape = 's32[2]{0}', space=sflag, size = 0x8, scoped, tag = 'scoped memory for tpu_custom_call.1']
    #allocation4 [shape = 's32[2]{0}', space=sflag, size = 0x8, scoped, tag = 'scoped memory for tpu_custom_call.1']
    #allocation5 [shape = 'u8[8192]{0}', space=vmem, size = 0x2000, scoped, tag = 'output window, operand 1']
    %8 = vsyncpa [#allocation3], 0
    %s9 = scalar_lea.sflag [#allocation3], 1
    %10 = vsyncpa %s9, 0
    %11 = vsyncpa [#allocation4], 0
    %s12 = scalar_lea.sflag [#allocation4], 1
    %13 = vsyncpa %s12, 0
    loop: start=0, step=1, limit=4
    $region2: #{tpu_custom_call.1} parent=1 // loop_pre_header
      _
    $region3: #{tpu_custom_call.1} parent=1 // loop_header
      %s15 = sphi 0, %s19
      %p16 = scmp.ge.s32.totalorder %s15, 4
      %s22 = sphi 0, %s34
      %s23 = sphi 0, %s30
      %s24 = sphi 0, %s22
      %s25 = sphi 0, %s23
      %s26 = sphi 0, %s24
      %s27 = sphi 0, %s25
      %s39 = sphi 0, %s41
      %s42 = sphi 0, %s39
      %s43 = sphi 0, %s42
      %s59 = sphi 0, %s43
      %s65 = sphi 0, %s67
      %s68 = sphi 0, %s65
      %s69 = sphi 0, %s68
      %s85 = sphi 0, %s69
      %s91 = sphi 0, %s93
      %s94 = sphi 0, %s91
      %s95 = sphi 0, %s94
      %s111 = sphi 0, %s95
    $region4: #{tpu_custom_call.1} parent=1 // loop_header_branch
      %18 = sbr.rel (%p16) target = $region8
    $region5: #{tpu_custom_call.1} parent=1 // loop_body
      %s20 = ssub.s32 %s15, 1
      %s21 = ssub.s32 %s15, 2
      %s28 = sadd.s32 1, %s23
      %p29 = scmp.ge.s32.totalorder %s28, 1
      %s30 = scalar_select %p29, 0, %s28
      %s31 = sadd.s32 1, %s22
      %s32 = scalar_select %p29, %s31, %s22
      %p33 = scmp.ge.s32.totalorder %s32, 2
      %s34 = scalar_select %p33, 0, %s32
      %s35 = ssub.s32 %s22, %s34
      %s36 = ssub.s32 %s23, %s30
      %s37 = sor.u32 %s35, %s36
      %p38 = scmp.eq.s32.totalorder %s37, 0
      %s40 = sadd.s32 %s39, 1
      %s41 = scalar_select %p38, %s39, %s40
      %p44 = pneg %p38
      %p45 = scmp.eq.s32.totalorder %s15, 1
      %p46 = por %p44, %p45
      %p47 = scmp.ne.s32.totalorder %s39, %s42
      %p48 = scmp.eq.s32.totalorder %s15, 0
      %p49 = por %p47, %p48
      %p50 = scmp.ne.s32.totalorder %s39, %s42
      %p51 = scmp.eq.s32.totalorder %s20, 1
      %p52 = por %p50, %p51
      %p53 = scmp.ne.s32.totalorder %s42, %s43
      %p54 = scmp.eq.s32.totalorder %s20, 0
      %p55 = por %p53, %p54
      %p56 = scmp.ne.s32.totalorder %s42, %s43
      %p57 = scmp.eq.s32.totalorder %s21, 1
      %p58 = por %p56, %p57
      %p60 = scmp.ne.s32.totalorder %s43, %s59
      %p61 = scmp.eq.s32.totalorder %s21, 0
      %p62 = por %p60, %p61
      %s63 = ssub.s32 %s22, %s34
      %p64 = scmp.eq.s32.totalorder %s63, 0
      %s66 = sadd.s32 %s65, 1
      %s67 = scalar_select %p64, %s65, %s66
      %p70 = pneg %p64
      %p71 = scmp.eq.s32.totalorder %s15, 1
      %p72 = por %p70, %p71
      %p73 = scmp.ne.s32.totalorder %s65, %s68
      %p74 = scmp.eq.s32.totalorder %s15, 0
      %p75 = por %p73, %p74
      %p76 = scmp.ne.s32.totalorder %s65, %s68
      %p77 = scmp.eq.s32.totalorder %s20, 1
      %p78 = por %p76, %p77
      %p79 = scmp.ne.s32.totalorder %s68, %s69
      %p80 = scmp.eq.s32.totalorder %s20, 0
      %p81 = por %p79, %p80
      %p82 = scmp.ne.s32.totalorder %s68, %s69
      %p83 = scmp.eq.s32.totalorder %s21, 1
      %p84 = por %p82, %p83
      %p86 = scmp.ne.s32.totalorder %s69, %s85
      %p87 = scmp.eq.s32.totalorder %s21, 0
      %p88 = por %p86, %p87
      %s89 = ssub.s32 %s22, %s34
      %p90 = scmp.eq.s32.totalorder %s89, 0
      %s92 = sadd.s32 %s91, 1
      %s93 = scalar_select %p90, %s91, %s92
      %p96 = pneg %p90
      %p97 = scmp.eq.s32.totalorder %s15, 1
      %p98 = por %p96, %p97
      %p99 = scmp.ne.s32.totalorder %s91, %s94
      %p100 = scmp.eq.s32.totalorder %s15, 0
      %p101 = por %p99, %p100
      %p102 = scmp.ne.s32.totalorder %s91, %s94
      %p103 = scmp.eq.s32.totalorder %s20, 1
      %p104 = por %p102, %p103
      %p105 = scmp.ne.s32.totalorder %s94, %s95
      %p106 = scmp.eq.s32.totalorder %s20, 0
      %p107 = por %p105, %p106
      %p108 = scmp.ne.s32.totalorder %s94, %s95
      %p109 = scmp.eq.s32.totalorder %s21, 1
      %p110 = por %p108, %p109
      %p112 = scmp.ne.s32.totalorder %s95, %s111
      %p113 = scmp.eq.s32.totalorder %s21, 0
      %p114 = por %p112, %p113
      %p115 = scmp.le.s32.totalorder 1, %s15
      %p116 = scmp.lt.s32.totalorder %s15, 3
      %p117 = pnand %p115, %p116
      %p118 = pneg %p117
      // Predicated region
      $region9: #{tpu_custom_call.1} parent=5 // pred_check
        _
      $region10: #{tpu_custom_call.1} parent=5 // pred_check_branch
        %120 = sbr.rel (%p117) target = $region12
      $region11: #{tpu_custom_call.1} parent=5 // pred_region
        %s121 = ssub.s32 %s15, 1
      $region12: #{tpu_custom_call.1} parent=5 // pred_fallthru
        _
      %p122 = scmp.lt.s32.totalorder %s15, 2
      // Predicated region
      $region13: #{tpu_custom_call.1} parent=5 // pred_check
        %p123 = pneg %p122
      $region14: #{tpu_custom_call.1} parent=5 // pred_check_branch
        %125 = sbr.rel (%p123) target = $region16
      $region15: #{tpu_custom_call.1} parent=5 // pred_region
        // Predicated region
        $region17: #{tpu_custom_call.1} parent=15 // pred_check
          %p126 = pneg %p49
        $region18: #{tpu_custom_call.1} parent=15 // pred_check_branch
          %128 = sbr.rel (%p126) target = $region20
        $region19: #{tpu_custom_call.1} parent=15 // pred_region
          %s129 = sand.u32 %s39, 1
          %s130 = scalar_lea.sflag [#allocation3], %s129
          %s131 = sand.u32 %s39, 1
          %s132 = smul.addr %s131, 256
          %s133 = scalar_lea.vmem [#allocation2], %s132
          %s134 = smul.u32 4, %s23
          %136 = vsyncadd %s130, 0
          %s137 = smul.addr %s22, 32
          %s138 = sadd.s32 %s134, %s137
          %s139 = smul.addr %s138, 8
          %s140 = scalar_lea.hbm %s0, %s139
          %s141 = sshll.u32 %s140, 4
          %s142 = int_to_ptr.hbm [resolvable:$true] %s141
          %s143 = sshll.u32 %s133, 4
          %s144 = int_to_ptr.vmem [resolvable:$true] %s143
          %149 = dma.hbm_to_vmem [thread:$0]  %s142, 4096, %s144, %s130, 128, 128, 8
        $region20: #{tpu_custom_call.1} parent=15 // pred_fallthru
          _
      $region16: #{tpu_custom_call.1} parent=5 // pred_fallthru
        _
      %p150 = scmp.le.s32.totalorder 1, %s15
      %p151 = scmp.lt.s32.totalorder %s15, 3
      %p152 = pnand %p150, %p151
      %p153 = pneg %p152
      // Predicated region
      $region21: #{tpu_custom_call.1} parent=5 // pred_check
        _
      $region22: #{tpu_custom_call.1} parent=5 // pred_check_branch
        %155 = sbr.rel (%p152) target = $region24
      $region23: #{tpu_custom_call.1} parent=5 // pred_region
        %s156 = ssub.s32 %s15, 1
        %s157 = sand.u32 %s42, 1
        %s158 = scalar_lea.sflag [#allocation3], %s157
        %s159 = sand.u32 %s42, 1
        %s160 = smul.addr %s159, 256
        %s161 = scalar_lea.vmem [#allocation2], %s160
        // Predicated region
        $region25: #{tpu_custom_call.1} parent=23 // pred_check
          %p162 = pneg %p55
        $region26: #{tpu_custom_call.1} parent=23 // pred_check_branch
          %164 = sbr.rel (%p162) target = $region28
        $region27: #{tpu_custom_call.1} parent=23 // pred_region
          %166 = dma.done %s158, 4096
        $region28: #{tpu_custom_call.1} parent=23 // pred_fallthru
          _
        %s167 = sand.u32 %s42, 1
        %s168 = scalar_lea.sflag [#allocation3], %s167
        %s169 = sand.u32 %s42, 1
        %s170 = smul.addr %s169, 256
        %s171 = scalar_lea.vmem [#allocation2], %s170
        %p172 = pneg %p55
        %p173 = pneg %p52
        %p174 = pneg %p81
        %p175 = pneg %p78
        %p176 = scmp.lt.s32.totalorder %s24, 1
        %s177 = scalar_select %p176, %s24, 1
        %s178 = smul.addr %s177, 8
        %s179 = scalar_lea.vmem %s1, %s178
        %p180 = pneg %p107
        %p181 = pneg %p104
        %s182 = sand.u32 %s94, 1
        %s183 = scalar_lea.sflag [#allocation4], %s182
        %s184 = sand.u32 %s94, 1
        %s185 = smul.addr %s184, 8
        %s186 = scalar_lea.vmem [#allocation5], %s185
        %s187 = smul.u32 4, %s25
        %p188 = scmp.lt.s32.totalorder %s24, 1
        %s189 = scalar_select %p188, %s24, 1
        %s190 = smul.addr %s189, 8
        %s191 = scalar_lea.vmem %s1, %s190
        %v192 = vld [vmem:[%s161] sm:$0xff]
        %v193 = vld [vmem:[%s161 + $0x8] sm:$0xff]
        %v194 = vld [vmem:[%s161 + $0x10] sm:$0xff]
        %v195 = vld [vmem:[%s161 + $0x18] sm:$0xff]
        %v196 = vld [vmem:[%s161 + $0x20] sm:$0xff]
        %v197 = vld [vmem:[%s161 + $0x28] sm:$0xff]
        %v198 = vld [vmem:[%s161 + $0x30] sm:$0xff]
        %v199 = vld [vmem:[%s161 + $0x38] sm:$0xff]
        %v200 = vld [vmem:[%s161 + $0x40] sm:$0xff]
        %v201 = vld [vmem:[%s161 + $0x48] sm:$0xff]
        %v202 = vld [vmem:[%s161 + $0x50] sm:$0xff]
        %v203 = vld [vmem:[%s161 + $0x58] sm:$0xff]
        %v204 = vld [vmem:[%s161 + $0x60] sm:$0xff]
        %v205 = vld [vmem:[%s161 + $0x68] sm:$0xff]
        %v206 = vld [vmem:[%s161 + $0x70] sm:$0xff]
        %v207 = vld [vmem:[%s161 + $0x78] sm:$0xff]
        %v208 = vld [vmem:[%s161 + $0x80] sm:$0xff]
        %v209 = vld [vmem:[%s161 + $0x88] sm:$0xff]
        %v210 = vld [vmem:[%s161 + $0x90] sm:$0xff]
        %v211 = vld [vmem:[%s161 + $0x98] sm:$0xff]
        %v212 = vld [vmem:[%s161 + $0xa0] sm:$0xff]
        %v213 = vld [vmem:[%s161 + $0xa8] sm:$0xff]
        %v214 = vld [vmem:[%s161 + $0xb0] sm:$0xff]
        %v215 = vld [vmem:[%s161 + $0xb8] sm:$0xff]
        %v216 = vld [vmem:[%s161 + $0xc0] sm:$0xff]
        %v217 = vld [vmem:[%s161 + $0xc8] sm:$0xff]
        %v218 = vld [vmem:[%s161 + $0xd0] sm:$0xff]
        %v219 = vld [vmem:[%s161 + $0xd8] sm:$0xff]
        %v220 = vld [vmem:[%s161 + $0xe0] sm:$0xff]
        %v221 = vld [vmem:[%s161 + $0xe8] sm:$0xff]
        %v222 = vld [vmem:[%s161 + $0xf0] sm:$0xff]
        %v223 = vld [vmem:[%s161 + $0xf8] sm:$0xff]
        %vm224 = vcmask 261120
        %v225 = vsel %vm224, %v192, 0.0
        %226 = vadd.xlane.f32.xlu0 %v225
        %v227 = vpop.xlane.xlu0 %226
        %v228 = vsel %vm224, %v193, 0.0
        %229 = vadd.xlane.f32.xlu0 %v228
        %v230 = vpop.xlane.xlu0 %229
        %v231 = vsel %vm224, %v194, 0.0
        %232 = vadd.xlane.f32.xlu0 %v231
        %v233 = vpop.xlane.xlu0 %232
        %v234 = vsel %vm224, %v195, 0.0
        %235 = vadd.xlane.f32.xlu0 %v234
        %v236 = vpop.xlane.xlu0 %235
        %v237 = vsel %vm224, %v196, 0.0
        %238 = vadd.xlane.f32.xlu0 %v237
        %v239 = vpop.xlane.xlu0 %238
        %v240 = vsel %vm224, %v197, 0.0
        %241 = vadd.xlane.f32.xlu0 %v240
        %v242 = vpop.xlane.xlu0 %241
        %v243 = vsel %vm224, %v198, 0.0
        %244 = vadd.xlane.f32.xlu0 %v243
        %v245 = vpop.xlane.xlu0 %244
        %v246 = vsel %vm224, %v199, 0.0
        %247 = vadd.xlane.f32.xlu0 %v246
        %v248 = vpop.xlane.xlu0 %247
        %v249 = vsel %vm224, %v200, 0.0
        %250 = vadd.xlane.f32.xlu0 %v249
        %v251 = vpop.xlane.xlu0 %250
        %v252 = vsel %vm224, %v201, 0.0
        %253 = vadd.xlane.f32.xlu0 %v252
        %v254 = vpop.xlane.xlu0 %253
        %v255 = vsel %vm224, %v202, 0.0
        %256 = vadd.xlane.f32.xlu0 %v255
        %v257 = vpop.xlane.xlu0 %256
        %v258 = vsel %vm224, %v203, 0.0
        %259 = vadd.xlane.f32.xlu0 %v258
        %v260 = vpop.xlane.xlu0 %259
        %v261 = vsel %vm224, %v204, 0.0
        %262 = vadd.xlane.f32.xlu0 %v261
        %v263 = vpop.xlane.xlu0 %262
        %v264 = vsel %vm224, %v205, 0.0
        %265 = vadd.xlane.f32.xlu0 %v264
        %v266 = vpop.xlane.xlu0 %265
        %v267 = vsel %vm224, %v206, 0.0
        %268 = vadd.xlane.f32.xlu0 %v267
        %v269 = vpop.xlane.xlu0 %268
        %v270 = vsel %vm224, %v207, 0.0
        %271 = vadd.xlane.f32.xlu0 %v270
        %v272 = vpop.xlane.xlu0 %271
        %v273 = vsel %vm224, %v208, 0.0
        %274 = vadd.xlane.f32.xlu0 %v273
        %v275 = vpop.xlane.xlu0 %274
        %v276 = vsel %vm224, %v209, 0.0
        %277 = vadd.xlane.f32.xlu0 %v276
        %v278 = vpop.xlane.xlu0 %277
        %v279 = vsel %vm224, %v210, 0.0
        %280 = vadd.xlane.f32.xlu0 %v279
        %v281 = vpop.xlane.xlu0 %280
        %v282 = vsel %vm224, %v211, 0.0
        %283 = vadd.xlane.f32.xlu0 %v282
        %v284 = vpop.xlane.xlu0 %283
        %v285 = vsel %vm224, %v212, 0.0
        %286 = vadd.xlane.f32.xlu0 %v285
        %v287 = vpop.xlane.xlu0 %286
        %v288 = vsel %vm224, %v213, 0.0
        %289 = vadd.xlane.f32.xlu0 %v288
        %v290 = vpop.xlane.xlu0 %289
        %v291 = vsel %vm224, %v214, 0.0
        %292 = vadd.xlane.f32.xlu0 %v291
        %v293 = vpop.xlane.xlu0 %292
        %v294 = vsel %vm224, %v215, 0.0
        %295 = vadd.xlane.f32.xlu0 %v294
        %v296 = vpop.xlane.xlu0 %295
        %v297 = vsel %vm224, %v216, 0.0
        %298 = vadd.xlane.f32.xlu0 %v297
        %v299 = vpop.xlane.xlu0 %298
        %v300 = vsel %vm224, %v217, 0.0
        %301 = vadd.xlane.f32.xlu0 %v300
        %v302 = vpop.xlane.xlu0 %301
        %v303 = vsel %vm224, %v218, 0.0
        %304 = vadd.xlane.f32.xlu0 %v303
        %v305 = vpop.xlane.xlu0 %304
        %v306 = vsel %vm224, %v219, 0.0
        %307 = vadd.xlane.f32.xlu0 %v306
        %v308 = vpop.xlane.xlu0 %307
        %v309 = vsel %vm224, %v220, 0.0
        %310 = vadd.xlane.f32.xlu0 %v309
        %v311 = vpop.xlane.xlu0 %310
        %v312 = vsel %vm224, %v221, 0.0
        %313 = vadd.xlane.f32.xlu0 %v312
        %v314 = vpop.xlane.xlu0 %313
        %v315 = vsel %vm224, %v222, 0.0
        %316 = vadd.xlane.f32.xlu0 %v315
        %v317 = vpop.xlane.xlu0 %316
        %v318 = vsel %vm224, %v223, 0.0
        %319 = vadd.xlane.f32.xlu0 %v318
        %v320 = vpop.xlane.xlu0 %319
        %v353 = vlaneseq
        %v354 = vand.u32 %v353, 127
        %v355 = vperm.slane %v227, %v354
        %v356 = vadd.s32 %v354, 4294967288
        %v357 = vperm.slane %v230, %v356
        %vm358 = vcmask 130112
        %v359 = vsel %vm358, %v357, %v355
        %v360 = vadd.s32 %v354, 4294967280
        %v361 = vperm.slane %v233, %v360
        %vm362 = vcmask 195712
        %v363 = vsel %vm362, %v361, %v359
        %v364 = vadd.s32 %v354, 4294967272
        %v365 = vperm.slane %v236, %v364
        %vm366 = vcmask 261312
        %v367 = vsel %vm366, %v365, %v363
        %v368 = vperm.slane %v239, %v354
        %v369 = vperm.slane %v242, %v356
        %v370 = vsel %vm358, %v369, %v368
        %v371 = vperm.slane %v245, %v360
        %v372 = vsel %vm362, %v371, %v370
        %v373 = vperm.slane %v248, %v364
        %v374 = vsel %vm366, %v373, %v372
        %v375 = vperm.slane %v251, %v354
        %v376 = vperm.slane %v254, %v356
        %v377 = vsel %vm358, %v376, %v375
        %v378 = vperm.slane %v257, %v360
        %v379 = vsel %vm362, %v378, %v377
        %v380 = vperm.slane %v260, %v364
        %v381 = vsel %vm366, %v380, %v379
        %v382 = vperm.slane %v263, %v354
        %v383 = vperm.slane %v266, %v356
        %v384 = vsel %vm358, %v383, %v382
        %v385 = vperm.slane %v269, %v360
        %v386 = vsel %vm362, %v385, %v384
        %v387 = vperm.slane %v272, %v364
        %v388 = vsel %vm366, %v387, %v386
        %v389 = vperm.slane %v275, %v354
        %v390 = vperm.slane %v278, %v356
        %v391 = vsel %vm358, %v390, %v389
        %v392 = vperm.slane %v281, %v360
        %v393 = vsel %vm362, %v392, %v391
        %v394 = vperm.slane %v284, %v364
        %v395 = vsel %vm366, %v394, %v393
        %v396 = vperm.slane %v287, %v354
        %v397 = vperm.slane %v290, %v356
        %v398 = vsel %vm358, %v397, %v396
        %v399 = vperm.slane %v293, %v360
        %v400 = vsel %vm362, %v399, %v398
        %v401 = vperm.slane %v296, %v364
        %v402 = vsel %vm366, %v401, %v400
        %v403 = vperm.slane %v299, %v354
        %v404 = vperm.slane %v302, %v356
        %v405 = vsel %vm358, %v404, %v403
        %v406 = vperm.slane %v305, %v360
        %v407 = vsel %vm362, %v406, %v405
        %v408 = vperm.slane %v308, %v364
        %v409 = vsel %vm366, %v408, %v407
        %v410 = vperm.slane %v311, %v354
        %v411 = vperm.slane %v314, %v356
        %v412 = vsel %vm358, %v411, %v410
        %v413 = vperm.slane %v317, %v360
        %v414 = vsel %vm362, %v413, %v412
        %v415 = vperm.slane %v320, %v364
        %v416 = vsel %vm366, %v415, %v414
        %vm417 = vcmask 1041409
        %v418 = vsel %vm417, %v374, %v367
        %vm419 = vcmask 1042434
        %v420 = vsel %vm419, %v381, %v418
        %vm421 = vcmask 1043459
        %v422 = vsel %vm421, %v388, %v420
        %vm423 = vcmask 1044484
        %v424 = vsel %vm423, %v395, %v422
        %vm425 = vcmask 1045509
        %v426 = vsel %vm425, %v402, %v424
        %vm427 = vcmask 1046534
        %v428 = vsel %vm427, %v409, %v426
        %vm429 = vcmask 1047559
        %v430 = vsel %vm429, %v416, %v428
        %v432 = vsel %vm224, %v430, 0.0
        %433 = vadd.xlane.f32.xlu0 %v432
        %v434 = vpop.xlane.xlu0 %433
        %v435 = vmul.f32 %v192, %v192
        %v436 = vmul.f32 %v193, %v193
        %v437 = vmul.f32 %v194, %v194
        %v438 = vmul.f32 %v195, %v195
        %v439 = vmul.f32 %v196, %v196
        %v440 = vmul.f32 %v197, %v197
        %v441 = vmul.f32 %v198, %v198
        %v442 = vmul.f32 %v199, %v199
        %v443 = vmul.f32 %v200, %v200
        %v444 = vmul.f32 %v201, %v201
        %v445 = vmul.f32 %v202, %v202
        %v446 = vmul.f32 %v203, %v203
        %v447 = vmul.f32 %v204, %v204
        %v448 = vmul.f32 %v205, %v205
        %v449 = vmul.f32 %v206, %v206
        %v450 = vmul.f32 %v207, %v207
        %v451 = vmul.f32 %v208, %v208
        %v452 = vmul.f32 %v209, %v209
        %v453 = vmul.f32 %v210, %v210
        %v454 = vmul.f32 %v211, %v211
        %v455 = vmul.f32 %v212, %v212
        %v456 = vmul.f32 %v213, %v213
        %v457 = vmul.f32 %v214, %v214
        %v458 = vmul.f32 %v215, %v215
        %v459 = vmul.f32 %v216, %v216
        %v460 = vmul.f32 %v217, %v217
        %v461 = vmul.f32 %v218, %v218
        %v462 = vmul.f32 %v219, %v219
        %v463 = vmul.f32 %v220, %v220
        %v464 = vmul.f32 %v221, %v221
        %v465 = vmul.f32 %v222, %v222
        %v466 = vmul.f32 %v223, %v223
        %v467 = vsel %vm224, %v435, 0.0
        %468 = vadd.xlane.f32.xlu0 %v467
        %v469 = vpop.xlane.xlu0 %468
        %v470 = vsel %vm224, %v436, 0.0
        %471 = vadd.xlane.f32.xlu0 %v470
        %v472 = vpop.xlane.xlu0 %471
        %v473 = vsel %vm224, %v437, 0.0
        %474 = vadd.xlane.f32.xlu0 %v473
        %v475 = vpop.xlane.xlu0 %474
        %v476 = vsel %vm224, %v438, 0.0
        %477 = vadd.xlane.f32.xlu0 %v476
        %v478 = vpop.xlane.xlu0 %477
        %v479 = vsel %vm224, %v439, 0.0
        %480 = vadd.xlane.f32.xlu0 %v479
        %v481 = vpop.xlane.xlu0 %480
        %v482 = vsel %vm224, %v440, 0.0
        %483 = vadd.xlane.f32.xlu0 %v482
        %v484 = vpop.xlane.xlu0 %483
        %v485 = vsel %vm224, %v441, 0.0
        %486 = vadd.xlane.f32.xlu0 %v485
        %v487 = vpop.xlane.xlu0 %486
        %v488 = vsel %vm224, %v442, 0.0
        %489 = vadd.xlane.f32.xlu0 %v488
        %v490 = vpop.xlane.xlu0 %489
        %v491 = vsel %vm224, %v443, 0.0
        %492 = vadd.xlane.f32.xlu0 %v491
        %v493 = vpop.xlane.xlu0 %492
        %v494 = vsel %vm224, %v444, 0.0
        %495 = vadd.xlane.f32.xlu0 %v494
        %v496 = vpop.xlane.xlu0 %495
        %v497 = vsel %vm224, %v445, 0.0
        %498 = vadd.xlane.f32.xlu0 %v497
        %v499 = vpop.xlane.xlu0 %498
        %v500 = vsel %vm224, %v446, 0.0
        %501 = vadd.xlane.f32.xlu0 %v500
        %v502 = vpop.xlane.xlu0 %501
        %v503 = vsel %vm224, %v447, 0.0
        %504 = vadd.xlane.f32.xlu0 %v503
        %v505 = vpop.xlane.xlu0 %504
        %v506 = vsel %vm224, %v448, 0.0
        %507 = vadd.xlane.f32.xlu0 %v506
        %v508 = vpop.xlane.xlu0 %507
        %v509 = vsel %vm224, %v449, 0.0
        %510 = vadd.xlane.f32.xlu0 %v509
        %v511 = vpop.xlane.xlu0 %510
        %v512 = vsel %vm224, %v450, 0.0
        %513 = vadd.xlane.f32.xlu0 %v512
        %v514 = vpop.xlane.xlu0 %513
        %v515 = vsel %vm224, %v451, 0.0
        %516 = vadd.xlane.f32.xlu0 %v515
        %v517 = vpop.xlane.xlu0 %516
        %v518 = vsel %vm224, %v452, 0.0
        %519 = vadd.xlane.f32.xlu0 %v518
        %v520 = vpop.xlane.xlu0 %519
        %v521 = vsel %vm224, %v453, 0.0
        %522 = vadd.xlane.f32.xlu0 %v521
        %v523 = vpop.xlane.xlu0 %522
        %v524 = vsel %vm224, %v454, 0.0
        %525 = vadd.xlane.f32.xlu0 %v524
        %v526 = vpop.xlane.xlu0 %525
        %v527 = vsel %vm224, %v455, 0.0
        %528 = vadd.xlane.f32.xlu0 %v527
        %v529 = vpop.xlane.xlu0 %528
        %v530 = vsel %vm224, %v456, 0.0
        %531 = vadd.xlane.f32.xlu0 %v530
        %v532 = vpop.xlane.xlu0 %531
        %v533 = vsel %vm224, %v457, 0.0
        %534 = vadd.xlane.f32.xlu0 %v533
        %v535 = vpop.xlane.xlu0 %534
        %v536 = vsel %vm224, %v458, 0.0
        %537 = vadd.xlane.f32.xlu0 %v536
        %v538 = vpop.xlane.xlu0 %537
        %v539 = vsel %vm224, %v459, 0.0
        %540 = vadd.xlane.f32.xlu0 %v539
        %v541 = vpop.xlane.xlu0 %540
        %v542 = vsel %vm224, %v460, 0.0
        %543 = vadd.xlane.f32.xlu0 %v542
        %v544 = vpop.xlane.xlu0 %543
        %v545 = vsel %vm224, %v461, 0.0
        %546 = vadd.xlane.f32.xlu0 %v545
        %v547 = vpop.xlane.xlu0 %546
        %v548 = vsel %vm224, %v462, 0.0
        %549 = vadd.xlane.f32.xlu0 %v548
        %v550 = vpop.xlane.xlu0 %549
        %v551 = vsel %vm224, %v463, 0.0
        %552 = vadd.xlane.f32.xlu0 %v551
        %v553 = vpop.xlane.xlu0 %552
        %v554 = vsel %vm224, %v464, 0.0
        %555 = vadd.xlane.f32.xlu0 %v554
        %v556 = vpop.xlane.xlu0 %555
        %v557 = vsel %vm224, %v465, 0.0
        %558 = vadd.xlane.f32.xlu0 %v557
        %v559 = vpop.xlane.xlu0 %558
        %v560 = vsel %vm224, %v466, 0.0
        %561 = vadd.xlane.f32.xlu0 %v560
        %v562 = vpop.xlane.xlu0 %561
        %v595 = vperm.slane %v469, %v354
        %v596 = vperm.slane %v472, %v356
        %v597 = vsel %vm358, %v596, %v595
        %v598 = vperm.slane %v475, %v360
        %v599 = vsel %vm362, %v598, %v597
        %v600 = vperm.slane %v478, %v364
        %v601 = vsel %vm366, %v600, %v599
        %v602 = vperm.slane %v481, %v354
        %v603 = vperm.slane %v484, %v356
        %v604 = vsel %vm358, %v603, %v602
        %v605 = vperm.slane %v487, %v360
        %v606 = vsel %vm362, %v605, %v604
        %v607 = vperm.slane %v490, %v364
        %v608 = vsel %vm366, %v607, %v606
        %v609 = vperm.slane %v493, %v354
        %v610 = vperm.slane %v496, %v356
        %v611 = vsel %vm358, %v610, %v609
        %v612 = vperm.slane %v499, %v360
        %v613 = vsel %vm362, %v612, %v611
        %v614 = vperm.slane %v502, %v364
        %v615 = vsel %vm366, %v614, %v613
        %v616 = vperm.slane %v505, %v354
        %v617 = vperm.slane %v508, %v356
        %v618 = vsel %vm358, %v617, %v616
        %v619 = vperm.slane %v511, %v360
        %v620 = vsel %vm362, %v619, %v618
        %v621 = vperm.slane %v514, %v364
        %v622 = vsel %vm366, %v621, %v620
        %v623 = vperm.slane %v517, %v354
        %v624 = vperm.slane %v520, %v356
        %v625 = vsel %vm358, %v624, %v623
        %v626 = vperm.slane %v523, %v360
        %v627 = vsel %vm362, %v626, %v625
        %v628 = vperm.slane %v526, %v364
        %v629 = vsel %vm366, %v628, %v627
        %v630 = vperm.slane %v529, %v354
        %v631 = vperm.slane %v532, %v356
        %v632 = vsel %vm358, %v631, %v630
        %v633 = vperm.slane %v535, %v360
        %v634 = vsel %vm362, %v633, %v632
        %v635 = vperm.slane %v538, %v364
        %v636 = vsel %vm366, %v635, %v634
        %v637 = vperm.slane %v541, %v354
        %v638 = vperm.slane %v544, %v356
        %v639 = vsel %vm358, %v638, %v637
        %v640 = vperm.slane %v547, %v360
        %v641 = vsel %vm362, %v640, %v639
        %v642 = vperm.slane %v550, %v364
        %v643 = vsel %vm366, %v642, %v641
        %v644 = vperm.slane %v553, %v354
        %v645 = vperm.slane %v556, %v356
        %v646 = vsel %vm358, %v645, %v644
        %v647 = vperm.slane %v559, %v360
        %v648 = vsel %vm362, %v647, %v646
        %v649 = vperm.slane %v562, %v364
        %v650 = vsel %vm366, %v649, %v648
        %v651 = vsel %vm417, %v608, %v601
        %v652 = vsel %vm419, %v615, %v651
        %v653 = vsel %vm421, %v622, %v652
        %v654 = vsel %vm423, %v629, %v653
        %v655 = vsel %vm425, %v636, %v654
        %v656 = vsel %vm427, %v643, %v655
        %v657 = vsel %vm429, %v650, %v656
        %v659 = vsel %vm224, %v657, 0.0
        %660 = vadd.xlane.f32.xlu0 %v659
        %v661 = vpop.xlane.xlu0 %660
        %vm662 = vcmask 7168
        %v663 = vsel %vm662, %v434, %v661
        %s664 = smul.u32 %s25, 32
        %v665 = vstv %s664
        %v666 = vadd.s32 %v665, %v354
        %v667 = vsel %vm224, %v192, -inf
        %668 = vmax.xlane.f32.xlu0 %v667
        %v669 = vpop.xlane.xlu0 %668
        %v670 = vsel %vm224, %v193, -inf
        %671 = vmax.xlane.f32.xlu0 %v670
        %v672 = vpop.xlane.xlu0 %671
        %v673 = vsel %vm224, %v194, -inf
        %674 = vmax.xlane.f32.xlu0 %v673
        %v675 = vpop.xlane.xlu0 %674
        %v676 = vsel %vm224, %v195, -inf
        %677 = vmax.xlane.f32.xlu0 %v676
        %v678 = vpop.xlane.xlu0 %677
        %v679 = vsel %vm224, %v196, -inf
        %680 = vmax.xlane.f32.xlu0 %v679
        %v681 = vpop.xlane.xlu0 %680
        %v682 = vsel %vm224, %v197, -inf
        %683 = vmax.xlane.f32.xlu0 %v682
        %v684 = vpop.xlane.xlu0 %683
        %v685 = vsel %vm224, %v198, -inf
        %686 = vmax.xlane.f32.xlu0 %v685
        %v687 = vpop.xlane.xlu0 %686
        %v688 = vsel %vm224, %v199, -inf
        %689 = vmax.xlane.f32.xlu0 %v688
        %v690 = vpop.xlane.xlu0 %689
        %v691 = vsel %vm224, %v200, -inf
        %692 = vmax.xlane.f32.xlu0 %v691
        %v693 = vpop.xlane.xlu0 %692
        %v694 = vsel %vm224, %v201, -inf
        %695 = vmax.xlane.f32.xlu0 %v694
        %v696 = vpop.xlane.xlu0 %695
        %v697 = vsel %vm224, %v202, -inf
        %698 = vmax.xlane.f32.xlu0 %v697
        %v699 = vpop.xlane.xlu0 %698
        %v700 = vsel %vm224, %v203, -inf
        %701 = vmax.xlane.f32.xlu0 %v700
        %v702 = vpop.xlane.xlu0 %701
        %v703 = vsel %vm224, %v204, -inf
        %704 = vmax.xlane.f32.xlu0 %v703
        %v705 = vpop.xlane.xlu0 %704
        %v706 = vsel %vm224, %v205, -inf
        %707 = vmax.xlane.f32.xlu0 %v706
        %v708 = vpop.xlane.xlu0 %707
        %v709 = vsel %vm224, %v206, -inf
        %710 = vmax.xlane.f32.xlu0 %v709
        %v711 = vpop.xlane.xlu0 %710
        %v712 = vsel %vm224, %v207, -inf
        %713 = vmax.xlane.f32.xlu0 %v712
        %v714 = vpop.xlane.xlu0 %713
        %v715 = vsel %vm224, %v208, -inf
        %716 = vmax.xlane.f32.xlu0 %v715
        %v717 = vpop.xlane.xlu0 %716
        %v718 = vsel %vm224, %v209, -inf
        %719 = vmax.xlane.f32.xlu0 %v718
        %v720 = vpop.xlane.xlu0 %719
        %v721 = vsel %vm224, %v210, -inf
        %722 = vmax.xlane.f32.xlu0 %v721
        %v723 = vpop.xlane.xlu0 %722
        %v724 = vsel %vm224, %v211, -inf
        %725 = vmax.xlane.f32.xlu0 %v724
        %v726 = vpop.xlane.xlu0 %725
        %v727 = vsel %vm224, %v212, -inf
        %728 = vmax.xlane.f32.xlu0 %v727
        %v729 = vpop.xlane.xlu0 %728
        %v730 = vsel %vm224, %v213, -inf
        %731 = vmax.xlane.f32.xlu0 %v730
        %v732 = vpop.xlane.xlu0 %731
        %v733 = vsel %vm224, %v214, -inf
        %734 = vmax.xlane.f32.xlu0 %v733
        %v735 = vpop.xlane.xlu0 %734
        %v736 = vsel %vm224, %v215, -inf
        %737 = vmax.xlane.f32.xlu0 %v736
        %v738 = vpop.xlane.xlu0 %737
        %v739 = vsel %vm224, %v216, -inf
        %740 = vmax.xlane.f32.xlu0 %v739
        %v741 = vpop.xlane.xlu0 %740
        %v742 = vsel %vm224, %v217, -inf
        %743 = vmax.xlane.f32.xlu0 %v742
        %v744 = vpop.xlane.xlu0 %743
        %v745 = vsel %vm224, %v218, -inf
        %746 = vmax.xlane.f32.xlu0 %v745
        %v747 = vpop.xlane.xlu0 %746
        %v748 = vsel %vm224, %v219, -inf
        %749 = vmax.xlane.f32.xlu0 %v748
        %v750 = vpop.xlane.xlu0 %749
        %v751 = vsel %vm224, %v220, -inf
        %752 = vmax.xlane.f32.xlu0 %v751
        %v753 = vpop.xlane.xlu0 %752
        %v754 = vsel %vm224, %v221, -inf
        %755 = vmax.xlane.f32.xlu0 %v754
        %v756 = vpop.xlane.xlu0 %755
        %v757 = vsel %vm224, %v222, -inf
        %758 = vmax.xlane.f32.xlu0 %v757
        %v759 = vpop.xlane.xlu0 %758
        %v760 = vsel %vm224, %v223, -inf
        %761 = vmax.xlane.f32.xlu0 %v760
        %v762 = vpop.xlane.xlu0 %761
        %vm763 = vcmp.ge.s32.totalorder %v666, 0
        %vm764 = vcmp.lt.s32.totalorder %v666, 32
        %vm765 = vmand %vm763, %vm764
        %v766 = vsel %vm765, 1, 0
        %vm767 = vcmp.eq.s32.totalorder %v766, 1
        %v800 = vperm.slane %v669, %v354
        %v801 = vperm.slane %v672, %v356
        %v802 = vsel %vm358, %v801, %v800
        %v803 = vperm.slane %v675, %v360
        %v804 = vsel %vm362, %v803, %v802
        %v805 = vperm.slane %v678, %v364
        %v806 = vsel %vm366, %v805, %v804
        %v807 = vperm.slane %v681, %v354
        %v808 = vperm.slane %v684, %v356
        %v809 = vsel %vm358, %v808, %v807
        %v810 = vperm.slane %v687, %v360
        %v811 = vsel %vm362, %v810, %v809
        %v812 = vperm.slane %v690, %v364
        %v813 = vsel %vm366, %v812, %v811
        %v814 = vperm.slane %v693, %v354
        %v815 = vperm.slane %v696, %v356
        %v816 = vsel %vm358, %v815, %v814
        %v817 = vperm.slane %v699, %v360
        %v818 = vsel %vm362, %v817, %v816
        %v819 = vperm.slane %v702, %v364
        %v820 = vsel %vm366, %v819, %v818
        %v821 = vperm.slane %v705, %v354
        %v822 = vperm.slane %v708, %v356
        %v823 = vsel %vm358, %v822, %v821
        %v824 = vperm.slane %v711, %v360
        %v825 = vsel %vm362, %v824, %v823
        %v826 = vperm.slane %v714, %v364
        %v827 = vsel %vm366, %v826, %v825
        %v828 = vperm.slane %v717, %v354
        %v829 = vperm.slane %v720, %v356
        %v830 = vsel %vm358, %v829, %v828
        %v831 = vperm.slane %v723, %v360
        %v832 = vsel %vm362, %v831, %v830
        %v833 = vperm.slane %v726, %v364
        %v834 = vsel %vm366, %v833, %v832
        %v835 = vperm.slane %v729, %v354
        %v836 = vperm.slane %v732, %v356
        %v837 = vsel %vm358, %v836, %v835
        %v838 = vperm.slane %v735, %v360
        %v839 = vsel %vm362, %v838, %v837
        %v840 = vperm.slane %v738, %v364
        %v841 = vsel %vm366, %v840, %v839
        %v842 = vperm.slane %v741, %v354
        %v843 = vperm.slane %v744, %v356
        %v844 = vsel %vm358, %v843, %v842
        %v845 = vperm.slane %v747, %v360
        %v846 = vsel %vm362, %v845, %v844
        %v847 = vperm.slane %v750, %v364
        %v848 = vsel %vm366, %v847, %v846
        %v849 = vperm.slane %v753, %v354
        %v850 = vperm.slane %v756, %v356
        %v851 = vsel %vm358, %v850, %v849
        %v852 = vperm.slane %v759, %v360
        %v853 = vsel %vm362, %v852, %v851
        %v854 = vperm.slane %v762, %v364
        %v855 = vsel %vm366, %v854, %v853
        %v856 = vsel %vm417, %v813, %v806
        %v857 = vsel %vm419, %v820, %v856
        %v858 = vsel %vm421, %v827, %v857
        %v859 = vsel %vm423, %v834, %v858
        %v860 = vsel %vm425, %v841, %v859
        %v861 = vsel %vm427, %v848, %v860
        %v862 = vsel %vm429, %v855, %v861
        %v864 = vsel %vm767, %v862, -inf
        %v865 = vsel %vm224, %v864, -inf
        %866 = vmax.xlane.f32.xlu0 %v865
        %v867 = vpop.xlane.xlu0 %866
        %vm868 = vcmask 130048
        %v869 = vsel %vm868, %v192, -inf
        %870 = vmax.xlane.f32.xlu0 %v869
        %v871 = vpop.xlane.xlu0 %870
        %v872 = vsel %vm868, %v193, -inf
        %873 = vmax.xlane.f32.xlu0 %v872
        %v874 = vpop.xlane.xlu0 %873
        %v875 = vsel %vm868, %v194, -inf
        %876 = vmax.xlane.f32.xlu0 %v875
        %v877 = vpop.xlane.xlu0 %876
        %v878 = vsel %vm868, %v195, -inf
        %879 = vmax.xlane.f32.xlu0 %v878
        %v880 = vpop.xlane.xlu0 %879
        %v881 = vsel %vm868, %v196, -inf
        %882 = vmax.xlane.f32.xlu0 %v881
        %v883 = vpop.xlane.xlu0 %882
        %v884 = vsel %vm868, %v197, -inf
        %885 = vmax.xlane.f32.xlu0 %v884
        %v886 = vpop.xlane.xlu0 %885
        %v887 = vsel %vm868, %v198, -inf
        %888 = vmax.xlane.f32.xlu0 %v887
        %v889 = vpop.xlane.xlu0 %888
        %v890 = vsel %vm868, %v199, -inf
        %891 = vmax.xlane.f32.xlu0 %v890
        %v892 = vpop.xlane.xlu0 %891
        %v893 = vsel %vm868, %v200, -inf
        %894 = vmax.xlane.f32.xlu0 %v893
        %v895 = vpop.xlane.xlu0 %894
        %v896 = vsel %vm868, %v201, -inf
        %897 = vmax.xlane.f32.xlu0 %v896
        %v898 = vpop.xlane.xlu0 %897
        %v899 = vsel %vm868, %v202, -inf
        %900 = vmax.xlane.f32.xlu0 %v899
        %v901 = vpop.xlane.xlu0 %900
        %v902 = vsel %vm868, %v203, -inf
        %903 = vmax.xlane.f32.xlu0 %v902
        %v904 = vpop.xlane.xlu0 %903
        %v905 = vsel %vm868, %v204, -inf
        %906 = vmax.xlane.f32.xlu0 %v905
        %v907 = vpop.xlane.xlu0 %906
        %v908 = vsel %vm868, %v205, -inf
        %909 = vmax.xlane.f32.xlu0 %v908
        %v910 = vpop.xlane.xlu0 %909
        %v911 = vsel %vm868, %v206, -inf
        %912 = vmax.xlane.f32.xlu0 %v911
        %v913 = vpop.xlane.xlu0 %912
        %v914 = vsel %vm868, %v207, -inf
        %915 = vmax.xlane.f32.xlu0 %v914
        %v916 = vpop.xlane.xlu0 %915
        %v917 = vsel %vm868, %v208, -inf
        %918 = vmax.xlane.f32.xlu0 %v917
        %v919 = vpop.xlane.xlu0 %918
        %v920 = vsel %vm868, %v209, -inf
        %921 = vmax.xlane.f32.xlu0 %v920
        %v922 = vpop.xlane.xlu0 %921
        %v923 = vsel %vm868, %v210, -inf
        %924 = vmax.xlane.f32.xlu0 %v923
        %v925 = vpop.xlane.xlu0 %924
        %v926 = vsel %vm868, %v211, -inf
        %927 = vmax.xlane.f32.xlu0 %v926
        %v928 = vpop.xlane.xlu0 %927
        %v929 = vsel %vm868, %v212, -inf
        %930 = vmax.xlane.f32.xlu0 %v929
        %v931 = vpop.xlane.xlu0 %930
        %v932 = vsel %vm868, %v213, -inf
        %933 = vmax.xlane.f32.xlu0 %v932
        %v934 = vpop.xlane.xlu0 %933
        %v935 = vsel %vm868, %v214, -inf
        %936 = vmax.xlane.f32.xlu0 %v935
        %v937 = vpop.xlane.xlu0 %936
        %v938 = vsel %vm868, %v215, -inf
        %939 = vmax.xlane.f32.xlu0 %v938
        %v940 = vpop.xlane.xlu0 %939
        %v941 = vsel %vm868, %v216, -inf
        %942 = vmax.xlane.f32.xlu0 %v941
        %v943 = vpop.xlane.xlu0 %942
        %v944 = vsel %vm868, %v217, -inf
        %945 = vmax.xlane.f32.xlu0 %v944
        %v946 = vpop.xlane.xlu0 %945
        %v947 = vsel %vm868, %v218, -inf
        %948 = vmax.xlane.f32.xlu0 %v947
        %v949 = vpop.xlane.xlu0 %948
        %v950 = vsel %vm868, %v219, -inf
        %951 = vmax.xlane.f32.xlu0 %v950
        %v952 = vpop.xlane.xlu0 %951
        %v953 = vsel %vm868, %v220, -inf
        %954 = vmax.xlane.f32.xlu0 %v953
        %v955 = vpop.xlane.xlu0 %954
        %v956 = vsel %vm868, %v221, -inf
        %957 = vmax.xlane.f32.xlu0 %v956
        %v958 = vpop.xlane.xlu0 %957
        %v959 = vsel %vm868, %v222, -inf
        %960 = vmax.xlane.f32.xlu0 %v959
        %v961 = vpop.xlane.xlu0 %960
        %v962 = vsel %vm868, %v223, -inf
        %963 = vmax.xlane.f32.xlu0 %v962
        %v964 = vpop.xlane.xlu0 %963
        %vm965 = vcmask 261248
        %v966 = vsel %vm965, %v192, -inf
        %967 = vmax.xlane.f32.xlu0 %v966
        %v968 = vpop.xlane.xlu0 %967
        %v969 = vsel %vm965, %v193, -inf
        %970 = vmax.xlane.f32.xlu0 %v969
        %v971 = vpop.xlane.xlu0 %970
        %v972 = vsel %vm965, %v194, -inf
        %973 = vmax.xlane.f32.xlu0 %v972
        %v974 = vpop.xlane.xlu0 %973
        %v975 = vsel %vm965, %v195, -inf
        %976 = vmax.xlane.f32.xlu0 %v975
        %v977 = vpop.xlane.xlu0 %976
        %v978 = vsel %vm965, %v196, -inf
        %979 = vmax.xlane.f32.xlu0 %v978
        %v980 = vpop.xlane.xlu0 %979
        %v981 = vsel %vm965, %v197, -inf
        %982 = vmax.xlane.f32.xlu0 %v981
        %v983 = vpop.xlane.xlu0 %982
        %v984 = vsel %vm965, %v198, -inf
        %985 = vmax.xlane.f32.xlu0 %v984
        %v986 = vpop.xlane.xlu0 %985
        %v987 = vsel %vm965, %v199, -inf
        %988 = vmax.xlane.f32.xlu0 %v987
        %v989 = vpop.xlane.xlu0 %988
        %v990 = vsel %vm965, %v200, -inf
        %991 = vmax.xlane.f32.xlu0 %v990
        %v992 = vpop.xlane.xlu0 %991
        %v993 = vsel %vm965, %v201, -inf
        %994 = vmax.xlane.f32.xlu0 %v993
        %v995 = vpop.xlane.xlu0 %994
        %v996 = vsel %vm965, %v202, -inf
        %997 = vmax.xlane.f32.xlu0 %v996
        %v998 = vpop.xlane.xlu0 %997
        %v999 = vsel %vm965, %v203, -inf
        %1000 = vmax.xlane.f32.xlu0 %v999
        %v1001 = vpop.xlane.xlu0 %1000
        %v1002 = vsel %vm965, %v204, -inf
        %1003 = vmax.xlane.f32.xlu0 %v1002
        %v1004 = vpop.xlane.xlu0 %1003
        %v1005 = vsel %vm965, %v205, -inf
        %1006 = vmax.xlane.f32.xlu0 %v1005
        %v1007 = vpop.xlane.xlu0 %1006
        %v1008 = vsel %vm965, %v206, -inf
        %1009 = vmax.xlane.f32.xlu0 %v1008
        %v1010 = vpop.xlane.xlu0 %1009
        %v1011 = vsel %vm965, %v207, -inf
        %1012 = vmax.xlane.f32.xlu0 %v1011
        %v1013 = vpop.xlane.xlu0 %1012
        %v1014 = vsel %vm965, %v208, -inf
        %1015 = vmax.xlane.f32.xlu0 %v1014
        %v1016 = vpop.xlane.xlu0 %1015
        %v1017 = vsel %vm965, %v209, -inf
        %1018 = vmax.xlane.f32.xlu0 %v1017
        %v1019 = vpop.xlane.xlu0 %1018
        %v1020 = vsel %vm965, %v210, -inf
        %1021 = vmax.xlane.f32.xlu0 %v1020
        %v1022 = vpop.xlane.xlu0 %1021
        %v1023 = vsel %vm965, %v211, -inf
        %1024 = vmax.xlane.f32.xlu0 %v1023
        %v1025 = vpop.xlane.xlu0 %1024
        %v1026 = vsel %vm965, %v212, -inf
        %1027 = vmax.xlane.f32.xlu0 %v1026
        %v1028 = vpop.xlane.xlu0 %1027
        %v1029 = vsel %vm965, %v213, -inf
        %1030 = vmax.xlane.f32.xlu0 %v1029
        %v1031 = vpop.xlane.xlu0 %1030
        %v1032 = vsel %vm965, %v214, -inf
        %1033 = vmax.xlane.f32.xlu0 %v1032
        %v1034 = vpop.xlane.xlu0 %1033
        %v1035 = vsel %vm965, %v215, -inf
        %1036 = vmax.xlane.f32.xlu0 %v1035
        %v1037 = vpop.xlane.xlu0 %1036
        %v1038 = vsel %vm965, %v216, -inf
        %1039 = vmax.xlane.f32.xlu0 %v1038
        %v1040 = vpop.xlane.xlu0 %1039
        %v1041 = vsel %vm965, %v217, -inf
        %1042 = vmax.xlane.f32.xlu0 %v1041
        %v1043 = vpop.xlane.xlu0 %1042
        %v1044 = vsel %vm965, %v218, -inf
        %1045 = vmax.xlane.f32.xlu0 %v1044
        %v1046 = vpop.xlane.xlu0 %1045
        %v1047 = vsel %vm965, %v219, -inf
        %1048 = vmax.xlane.f32.xlu0 %v1047
        %v1049 = vpop.xlane.xlu0 %1048
        %v1050 = vsel %vm965, %v220, -inf
        %1051 = vmax.xlane.f32.xlu0 %v1050
        %v1052 = vpop.xlane.xlu0 %1051
        %v1053 = vsel %vm965, %v221, -inf
        %1054 = vmax.xlane.f32.xlu0 %v1053
        %v1055 = vpop.xlane.xlu0 %1054
        %v1056 = vsel %vm965, %v222, -inf
        %1057 = vmax.xlane.f32.xlu0 %v1056
        %v1058 = vpop.xlane.xlu0 %1057
        %v1059 = vsel %vm965, %v223, -inf
        %1060 = vmax.xlane.f32.xlu0 %v1059
        %v1061 = vpop.xlane.xlu0 %1060
        %vm1062 = vcmp.lt.s32.totalorder %v666, 16
        %vm1063 = vmand %vm763, %vm1062
        %v1064 = vsel %vm1063, 1, 0
        %vm1065 = vcmp.eq.s32.totalorder %v1064, 1
        %v1098 = vperm.slane %v871, %v354
        %v1099 = vperm.slane %v874, %v356
        %v1100 = vsel %vm358, %v1099, %v1098
        %v1101 = vperm.slane %v877, %v360
        %v1102 = vsel %vm362, %v1101, %v1100
        %v1103 = vperm.slane %v880, %v364
        %v1104 = vsel %vm366, %v1103, %v1102
        %v1105 = vperm.slane %v883, %v354
        %v1106 = vperm.slane %v886, %v356
        %v1107 = vsel %vm358, %v1106, %v1105
        %v1108 = vperm.slane %v889, %v360
        %v1109 = vsel %vm362, %v1108, %v1107
        %v1110 = vperm.slane %v892, %v364
        %v1111 = vsel %vm366, %v1110, %v1109
        %v1112 = vperm.slane %v895, %v354
        %v1113 = vperm.slane %v898, %v356
        %v1114 = vsel %vm358, %v1113, %v1112
        %v1115 = vperm.slane %v901, %v360
        %v1116 = vsel %vm362, %v1115, %v1114
        %v1117 = vperm.slane %v904, %v364
        %v1118 = vsel %vm366, %v1117, %v1116
        %v1119 = vperm.slane %v907, %v354
        %v1120 = vperm.slane %v910, %v356
        %v1121 = vsel %vm358, %v1120, %v1119
        %v1122 = vperm.slane %v913, %v360
        %v1123 = vsel %vm362, %v1122, %v1121
        %v1124 = vperm.slane %v916, %v364
        %v1125 = vsel %vm366, %v1124, %v1123
        %v1126 = vperm.slane %v919, %v354
        %v1127 = vperm.slane %v922, %v356
        %v1128 = vsel %vm358, %v1127, %v1126
        %v1129 = vperm.slane %v925, %v360
        %v1130 = vsel %vm362, %v1129, %v1128
        %v1131 = vperm.slane %v928, %v364
        %v1132 = vsel %vm366, %v1131, %v1130
        %v1133 = vperm.slane %v931, %v354
        %v1134 = vperm.slane %v934, %v356
        %v1135 = vsel %vm358, %v1134, %v1133
        %v1136 = vperm.slane %v937, %v360
        %v1137 = vsel %vm362, %v1136, %v1135
        %v1138 = vperm.slane %v940, %v364
        %v1139 = vsel %vm366, %v1138, %v1137
        %v1140 = vperm.slane %v943, %v354
        %v1141 = vperm.slane %v946, %v356
        %v1142 = vsel %vm358, %v1141, %v1140
        %v1143 = vperm.slane %v949, %v360
        %v1144 = vsel %vm362, %v1143, %v1142
        %v1145 = vperm.slane %v952, %v364
        %v1146 = vsel %vm366, %v1145, %v1144
        %v1147 = vperm.slane %v955, %v354
        %v1148 = vperm.slane %v958, %v356
        %v1149 = vsel %vm358, %v1148, %v1147
        %v1150 = vperm.slane %v961, %v360
        %v1151 = vsel %vm362, %v1150, %v1149
        %v1152 = vperm.slane %v964, %v364
        %v1153 = vsel %vm366, %v1152, %v1151
        %v1154 = vsel %vm417, %v1111, %v1104
        %v1155 = vsel %vm419, %v1118, %v1154
        %v1156 = vsel %vm421, %v1125, %v1155
        %v1157 = vsel %vm423, %v1132, %v1156
        %v1158 = vsel %vm425, %v1139, %v1157
        %v1159 = vsel %vm427, %v1146, %v1158
        %v1160 = vsel %vm429, %v1153, %v1159
        %v1162 = vsel %vm1065, %v1160, -inf
        %v1163 = vsel %vm224, %v1162, -inf
        %1164 = vmax.xlane.f32.xlu0 %v1163
        %v1165 = vpop.xlane.xlu0 %1164
        %v1198 = vperm.slane %v968, %v354
        %v1199 = vperm.slane %v971, %v356
        %v1200 = vsel %vm358, %v1199, %v1198
        %v1201 = vperm.slane %v974, %v360
        %v1202 = vsel %vm362, %v1201, %v1200
        %v1203 = vperm.slane %v977, %v364
        %v1204 = vsel %vm366, %v1203, %v1202
        %v1205 = vperm.slane %v980, %v354
        %v1206 = vperm.slane %v983, %v356
        %v1207 = vsel %vm358, %v1206, %v1205
        %v1208 = vperm.slane %v986, %v360
        %v1209 = vsel %vm362, %v1208, %v1207
        %v1210 = vperm.slane %v989, %v364
        %v1211 = vsel %vm366, %v1210, %v1209
        %v1212 = vperm.slane %v992, %v354
        %v1213 = vperm.slane %v995, %v356
        %v1214 = vsel %vm358, %v1213, %v1212
        %v1215 = vperm.slane %v998, %v360
        %v1216 = vsel %vm362, %v1215, %v1214
        %v1217 = vperm.slane %v1001, %v364
        %v1218 = vsel %vm366, %v1217, %v1216
        %v1219 = vperm.slane %v1004, %v354
        %v1220 = vperm.slane %v1007, %v356
        %v1221 = vsel %vm358, %v1220, %v1219
        %v1222 = vperm.slane %v1010, %v360
        %v1223 = vsel %vm362, %v1222, %v1221
        %v1224 = vperm.slane %v1013, %v364
        %v1225 = vsel %vm366, %v1224, %v1223
        %v1226 = vperm.slane %v1016, %v354
        %v1227 = vperm.slane %v1019, %v356
        %v1228 = vsel %vm358, %v1227, %v1226
        %v1229 = vperm.slane %v1022, %v360
        %v1230 = vsel %vm362, %v1229, %v1228
        %v1231 = vperm.slane %v1025, %v364
        %v1232 = vsel %vm366, %v1231, %v1230
        %v1233 = vperm.slane %v1028, %v354
        %v1234 = vperm.slane %v1031, %v356
        %v1235 = vsel %vm358, %v1234, %v1233
        %v1236 = vperm.slane %v1034, %v360
        %v1237 = vsel %vm362, %v1236, %v1235
        %v1238 = vperm.slane %v1037, %v364
        %v1239 = vsel %vm366, %v1238, %v1237
        %v1240 = vperm.slane %v1040, %v354
        %v1241 = vperm.slane %v1043, %v356
        %v1242 = vsel %vm358, %v1241, %v1240
        %v1243 = vperm.slane %v1046, %v360
        %v1244 = vsel %vm362, %v1243, %v1242
        %v1245 = vperm.slane %v1049, %v364
        %v1246 = vsel %vm366, %v1245, %v1244
        %v1247 = vperm.slane %v1052, %v354
        %v1248 = vperm.slane %v1055, %v356
        %v1249 = vsel %vm358, %v1248, %v1247
        %v1250 = vperm.slane %v1058, %v360
        %v1251 = vsel %vm362, %v1250, %v1249
        %v1252 = vperm.slane %v1061, %v364
        %v1253 = vsel %vm366, %v1252, %v1251
        %v1254 = vsel %vm417, %v1211, %v1204
        %v1255 = vsel %vm419, %v1218, %v1254
        %v1256 = vsel %vm421, %v1225, %v1255
        %v1257 = vsel %vm423, %v1232, %v1256
        %v1258 = vsel %vm425, %v1239, %v1257
        %v1259 = vsel %vm427, %v1246, %v1258
        %v1260 = vsel %vm429, %v1253, %v1259
        %v1262 = vsel %vm1065, %v1260, -inf
        %v1263 = vsel %vm224, %v1262, -inf
        %1264 = vmax.xlane.f32.xlu0 %v1263
        %v1265 = vpop.xlane.xlu0 %1264
        %vm1266 = vcmp.ge.s32.totalorder %v666, 16
        %vm1267 = vmand %vm1266, %vm764
        %v1268 = vsel %vm1267, 1, 0
        %vm1269 = vcmp.eq.s32.totalorder %v1268, 1
        %v1270 = vsel %vm1269, %v1160, -inf
        %v1271 = vsel %vm224, %v1270, -inf
        %1272 = vmax.xlane.f32.xlu0 %v1271
        %v1273 = vpop.xlane.xlu0 %1272
        %v1274 = vsel %vm1269, %v1260, -inf
        %v1275 = vsel %vm224, %v1274, -inf
        %1276 = vmax.xlane.f32.xlu0 %v1275
        %v1277 = vpop.xlane.xlu0 %1276
        %vm1278 = vcmask 89088
        %v1279 = vsel %vm1278, %v192, -inf
        %1280 = vmax.xlane.f32.xlu0 %v1279
        %v1281 = vpop.xlane.xlu0 %1280
        %v1282 = vsel %vm1278, %v193, -inf
        %1283 = vmax.xlane.f32.xlu0 %v1282
        %v1284 = vpop.xlane.xlu0 %1283
        %v1285 = vsel %vm1278, %v194, -inf
        %1286 = vmax.xlane.f32.xlu0 %v1285
        %v1287 = vpop.xlane.xlu0 %1286
        %v1288 = vsel %vm1278, %v195, -inf
        %1289 = vmax.xlane.f32.xlu0 %v1288
        %v1290 = vpop.xlane.xlu0 %1289
        %v1291 = vsel %vm1278, %v196, -inf
        %1292 = vmax.xlane.f32.xlu0 %v1291
        %v1293 = vpop.xlane.xlu0 %1292
        %v1294 = vsel %vm1278, %v197, -inf
        %1295 = vmax.xlane.f32.xlu0 %v1294
        %v1296 = vpop.xlane.xlu0 %1295
        %v1297 = vsel %vm1278, %v198, -inf
        %1298 = vmax.xlane.f32.xlu0 %v1297
        %v1299 = vpop.xlane.xlu0 %1298
        %v1300 = vsel %vm1278, %v199, -inf
        %1301 = vmax.xlane.f32.xlu0 %v1300
        %v1302 = vpop.xlane.xlu0 %1301
        %v1303 = vsel %vm1278, %v200, -inf
        %1304 = vmax.xlane.f32.xlu0 %v1303
        %v1305 = vpop.xlane.xlu0 %1304
        %v1306 = vsel %vm1278, %v201, -inf
        %1307 = vmax.xlane.f32.xlu0 %v1306
        %v1308 = vpop.xlane.xlu0 %1307
        %v1309 = vsel %vm1278, %v202, -inf
        %1310 = vmax.xlane.f32.xlu0 %v1309
        %v1311 = vpop.xlane.xlu0 %1310
        %v1312 = vsel %vm1278, %v203, -inf
        %1313 = vmax.xlane.f32.xlu0 %v1312
        %v1314 = vpop.xlane.xlu0 %1313
        %v1315 = vsel %vm1278, %v204, -inf
        %1316 = vmax.xlane.f32.xlu0 %v1315
        %v1317 = vpop.xlane.xlu0 %1316
        %v1318 = vsel %vm1278, %v205, -inf
        %1319 = vmax.xlane.f32.xlu0 %v1318
        %v1320 = vpop.xlane.xlu0 %1319
        %v1321 = vsel %vm1278, %v206, -inf
        %1322 = vmax.xlane.f32.xlu0 %v1321
        %v1323 = vpop.xlane.xlu0 %1322
        %v1324 = vsel %vm1278, %v207, -inf
        %1325 = vmax.xlane.f32.xlu0 %v1324
        %v1326 = vpop.xlane.xlu0 %1325
        %v1327 = vsel %vm1278, %v208, -inf
        %1328 = vmax.xlane.f32.xlu0 %v1327
        %v1329 = vpop.xlane.xlu0 %1328
        %v1330 = vsel %vm1278, %v209, -inf
        %1331 = vmax.xlane.f32.xlu0 %v1330
        %v1332 = vpop.xlane.xlu0 %1331
        %v1333 = vsel %vm1278, %v210, -inf
        %1334 = vmax.xlane.f32.xlu0 %v1333
        %v1335 = vpop.xlane.xlu0 %1334
        %v1336 = vsel %vm1278, %v211, -inf
        %1337 = vmax.xlane.f32.xlu0 %v1336
        %v1338 = vpop.xlane.xlu0 %1337
        %v1339 = vsel %vm1278, %v212, -inf
        %1340 = vmax.xlane.f32.xlu0 %v1339
        %v1341 = vpop.xlane.xlu0 %1340
        %v1342 = vsel %vm1278, %v213, -inf
        %1343 = vmax.xlane.f32.xlu0 %v1342
        %v1344 = vpop.xlane.xlu0 %1343
        %v1345 = vsel %vm1278, %v214, -inf
        %1346 = vmax.xlane.f32.xlu0 %v1345
        %v1347 = vpop.xlane.xlu0 %1346
        %v1348 = vsel %vm1278, %v215, -inf
        %1349 = vmax.xlane.f32.xlu0 %v1348
        %v1350 = vpop.xlane.xlu0 %1349
        %v1351 = vsel %vm1278, %v216, -inf
        %1352 = vmax.xlane.f32.xlu0 %v1351
        %v1353 = vpop.xlane.xlu0 %1352
        %v1354 = vsel %vm1278, %v217, -inf
        %1355 = vmax.xlane.f32.xlu0 %v1354
        %v1356 = vpop.xlane.xlu0 %1355
        %v1357 = vsel %vm1278, %v218, -inf
        %1358 = vmax.xlane.f32.xlu0 %v1357
        %v1359 = vpop.xlane.xlu0 %1358
        %v1360 = vsel %vm1278, %v219, -inf
        %1361 = vmax.xlane.f32.xlu0 %v1360
        %v1362 = vpop.xlane.xlu0 %1361
        %v1363 = vsel %vm1278, %v220, -inf
        %1364 = vmax.xlane.f32.xlu0 %v1363
        %v1365 = vpop.xlane.xlu0 %1364
        %v1366 = vsel %vm1278, %v221, -inf
        %1367 = vmax.xlane.f32.xlu0 %v1366
        %v1368 = vpop.xlane.xlu0 %1367
        %v1369 = vsel %vm1278, %v222, -inf
        %1370 = vmax.xlane.f32.xlu0 %v1369
        %v1371 = vpop.xlane.xlu0 %1370
        %v1372 = vsel %vm1278, %v223, -inf
        %1373 = vmax.xlane.f32.xlu0 %v1372
        %v1374 = vpop.xlane.xlu0 %1373
        %vm1375 = vcmask 179280
        %v1376 = vsel %vm1375, %v192, -inf
        %1377 = vmax.xlane.f32.xlu0 %v1376
        %v1378 = vpop.xlane.xlu0 %1377
        %v1379 = vsel %vm1375, %v193, -inf
        %1380 = vmax.xlane.f32.xlu0 %v1379
        %v1381 = vpop.xlane.xlu0 %1380
        %v1382 = vsel %vm1375, %v194, -inf
        %1383 = vmax.xlane.f32.xlu0 %v1382
        %v1384 = vpop.xlane.xlu0 %1383
        %v1385 = vsel %vm1375, %v195, -inf
        %1386 = vmax.xlane.f32.xlu0 %v1385
        %v1387 = vpop.xlane.xlu0 %1386
        %v1388 = vsel %vm1375, %v196, -inf
        %1389 = vmax.xlane.f32.xlu0 %v1388
        %v1390 = vpop.xlane.xlu0 %1389
        %v1391 = vsel %vm1375, %v197, -inf
        %1392 = vmax.xlane.f32.xlu0 %v1391
        %v1393 = vpop.xlane.xlu0 %1392
        %v1394 = vsel %vm1375, %v198, -inf
        %1395 = vmax.xlane.f32.xlu0 %v1394
        %v1396 = vpop.xlane.xlu0 %1395
        %v1397 = vsel %vm1375, %v199, -inf
        %1398 = vmax.xlane.f32.xlu0 %v1397
        %v1399 = vpop.xlane.xlu0 %1398
        %v1400 = vsel %vm1375, %v200, -inf
        %1401 = vmax.xlane.f32.xlu0 %v1400
        %v1402 = vpop.xlane.xlu0 %1401
        %v1403 = vsel %vm1375, %v201, -inf
        %1404 = vmax.xlane.f32.xlu0 %v1403
        %v1405 = vpop.xlane.xlu0 %1404
        %v1406 = vsel %vm1375, %v202, -inf
        %1407 = vmax.xlane.f32.xlu0 %v1406
        %v1408 = vpop.xlane.xlu0 %1407
        %v1409 = vsel %vm1375, %v203, -inf
        %1410 = vmax.xlane.f32.xlu0 %v1409
        %v1411 = vpop.xlane.xlu0 %1410
        %v1412 = vsel %vm1375, %v204, -inf
        %1413 = vmax.xlane.f32.xlu0 %v1412
        %v1414 = vpop.xlane.xlu0 %1413
        %v1415 = vsel %vm1375, %v205, -inf
        %1416 = vmax.xlane.f32.xlu0 %v1415
        %v1417 = vpop.xlane.xlu0 %1416
        %v1418 = vsel %vm1375, %v206, -inf
        %1419 = vmax.xlane.f32.xlu0 %v1418
        %v1420 = vpop.xlane.xlu0 %1419
        %v1421 = vsel %vm1375, %v207, -inf
        %1422 = vmax.xlane.f32.xlu0 %v1421
        %v1423 = vpop.xlane.xlu0 %1422
        %v1424 = vsel %vm1375, %v208, -inf
        %1425 = vmax.xlane.f32.xlu0 %v1424
        %v1426 = vpop.xlane.xlu0 %1425
        %v1427 = vsel %vm1375, %v209, -inf
        %1428 = vmax.xlane.f32.xlu0 %v1427
        %v1429 = vpop.xlane.xlu0 %1428
        %v1430 = vsel %vm1375, %v210, -inf
        %1431 = vmax.xlane.f32.xlu0 %v1430
        %v1432 = vpop.xlane.xlu0 %1431
        %v1433 = vsel %vm1375, %v211, -inf
        %1434 = vmax.xlane.f32.xlu0 %v1433
        %v1435 = vpop.xlane.xlu0 %1434
        %v1436 = vsel %vm1375, %v212, -inf
        %1437 = vmax.xlane.f32.xlu0 %v1436
        %v1438 = vpop.xlane.xlu0 %1437
        %v1439 = vsel %vm1375, %v213, -inf
        %1440 = vmax.xlane.f32.xlu0 %v1439
        %v1441 = vpop.xlane.xlu0 %1440
        %v1442 = vsel %vm1375, %v214, -inf
        %1443 = vmax.xlane.f32.xlu0 %v1442
        %v1444 = vpop.xlane.xlu0 %1443
        %v1445 = vsel %vm1375, %v215, -inf
        %1446 = vmax.xlane.f32.xlu0 %v1445
        %v1447 = vpop.xlane.xlu0 %1446
        %v1448 = vsel %vm1375, %v216, -inf
        %1449 = vmax.xlane.f32.xlu0 %v1448
        %v1450 = vpop.xlane.xlu0 %1449
        %v1451 = vsel %vm1375, %v217, -inf
        %1452 = vmax.xlane.f32.xlu0 %v1451
        %v1453 = vpop.xlane.xlu0 %1452
        %v1454 = vsel %vm1375, %v218, -inf
        %1455 = vmax.xlane.f32.xlu0 %v1454
        %v1456 = vpop.xlane.xlu0 %1455
        %v1457 = vsel %vm1375, %v219, -inf
        %1458 = vmax.xlane.f32.xlu0 %v1457
        %v1459 = vpop.xlane.xlu0 %1458
        %v1460 = vsel %vm1375, %v220, -inf
        %1461 = vmax.xlane.f32.xlu0 %v1460
        %v1462 = vpop.xlane.xlu0 %1461
        %v1463 = vsel %vm1375, %v221, -inf
        %1464 = vmax.xlane.f32.xlu0 %v1463
        %v1465 = vpop.xlane.xlu0 %1464
        %v1466 = vsel %vm1375, %v222, -inf
        %1467 = vmax.xlane.f32.xlu0 %v1466
        %v1468 = vpop.xlane.xlu0 %1467
        %v1469 = vsel %vm1375, %v223, -inf
        %1470 = vmax.xlane.f32.xlu0 %v1469
        %v1471 = vpop.xlane.xlu0 %1470
        %vm1472 = vcmask 261288
        %v1473 = vsel %vm1472, %v192, -inf
        %1474 = vmax.xlane.f32.xlu0 %v1473
        %v1475 = vpop.xlane.xlu0 %1474
        %v1476 = vsel %vm1472, %v193, -inf
        %1477 = vmax.xlane.f32.xlu0 %v1476
        %v1478 = vpop.xlane.xlu0 %1477
        %v1479 = vsel %vm1472, %v194, -inf
        %1480 = vmax.xlane.f32.xlu0 %v1479
        %v1481 = vpop.xlane.xlu0 %1480
        %v1482 = vsel %vm1472, %v195, -inf
        %1483 = vmax.xlane.f32.xlu0 %v1482
        %v1484 = vpop.xlane.xlu0 %1483
        %v1485 = vsel %vm1472, %v196, -inf
        %1486 = vmax.xlane.f32.xlu0 %v1485
        %v1487 = vpop.xlane.xlu0 %1486
        %v1488 = vsel %vm1472, %v197, -inf
        %1489 = vmax.xlane.f32.xlu0 %v1488
        %v1490 = vpop.xlane.xlu0 %1489
        %v1491 = vsel %vm1472, %v198, -inf
        %1492 = vmax.xlane.f32.xlu0 %v1491
        %v1493 = vpop.xlane.xlu0 %1492
        %v1494 = vsel %vm1472, %v199, -inf
        %1495 = vmax.xlane.f32.xlu0 %v1494
        %v1496 = vpop.xlane.xlu0 %1495
        %v1497 = vsel %vm1472, %v200, -inf
        %1498 = vmax.xlane.f32.xlu0 %v1497
        %v1499 = vpop.xlane.xlu0 %1498
        %v1500 = vsel %vm1472, %v201, -inf
        %1501 = vmax.xlane.f32.xlu0 %v1500
        %v1502 = vpop.xlane.xlu0 %1501
        %v1503 = vsel %vm1472, %v202, -inf
        %1504 = vmax.xlane.f32.xlu0 %v1503
        %v1505 = vpop.xlane.xlu0 %1504
        %v1506 = vsel %vm1472, %v203, -inf
        %1507 = vmax.xlane.f32.xlu0 %v1506
        %v1508 = vpop.xlane.xlu0 %1507
        %v1509 = vsel %vm1472, %v204, -inf
        %1510 = vmax.xlane.f32.xlu0 %v1509
        %v1511 = vpop.xlane.xlu0 %1510
        %v1512 = vsel %vm1472, %v205, -inf
        %1513 = vmax.xlane.f32.xlu0 %v1512
        %v1514 = vpop.xlane.xlu0 %1513
        %v1515 = vsel %vm1472, %v206, -inf
        %1516 = vmax.xlane.f32.xlu0 %v1515
        %v1517 = vpop.xlane.xlu0 %1516
        %v1518 = vsel %vm1472, %v207, -inf
        %1519 = vmax.xlane.f32.xlu0 %v1518
        %v1520 = vpop.xlane.xlu0 %1519
        %v1521 = vsel %vm1472, %v208, -inf
        %1522 = vmax.xlane.f32.xlu0 %v1521
        %v1523 = vpop.xlane.xlu0 %1522
        %v1524 = vsel %vm1472, %v209, -inf
        %1525 = vmax.xlane.f32.xlu0 %v1524
        %v1526 = vpop.xlane.xlu0 %1525
        %v1527 = vsel %vm1472, %v210, -inf
        %1528 = vmax.xlane.f32.xlu0 %v1527
        %v1529 = vpop.xlane.xlu0 %1528
        %v1530 = vsel %vm1472, %v211, -inf
        %1531 = vmax.xlane.f32.xlu0 %v1530
        %v1532 = vpop.xlane.xlu0 %1531
        %v1533 = vsel %vm1472, %v212, -inf
        %1534 = vmax.xlane.f32.xlu0 %v1533
        %v1535 = vpop.xlane.xlu0 %1534
        %v1536 = vsel %vm1472, %v213, -inf
        %1537 = vmax.xlane.f32.xlu0 %v1536
        %v1538 = vpop.xlane.xlu0 %1537
        %v1539 = vsel %vm1472, %v214, -inf
        %1540 = vmax.xlane.f32.xlu0 %v1539
        %v1541 = vpop.xlane.xlu0 %1540
        %v1542 = vsel %vm1472, %v215, -inf
        %1543 = vmax.xlane.f32.xlu0 %v1542
        %v1544 = vpop.xlane.xlu0 %1543
        %v1545 = vsel %vm1472, %v216, -inf
        %1546 = vmax.xlane.f32.xlu0 %v1545
        %v1547 = vpop.xlane.xlu0 %1546
        %v1548 = vsel %vm1472, %v217, -inf
        %1549 = vmax.xlane.f32.xlu0 %v1548
        %v1550 = vpop.xlane.xlu0 %1549
        %v1551 = vsel %vm1472, %v218, -inf
        %1552 = vmax.xlane.f32.xlu0 %v1551
        %v1553 = vpop.xlane.xlu0 %1552
        %v1554 = vsel %vm1472, %v219, -inf
        %1555 = vmax.xlane.f32.xlu0 %v1554
        %v1556 = vpop.xlane.xlu0 %1555
        %v1557 = vsel %vm1472, %v220, -inf
        %1558 = vmax.xlane.f32.xlu0 %v1557
        %v1559 = vpop.xlane.xlu0 %1558
        %v1560 = vsel %vm1472, %v221, -inf
        %1561 = vmax.xlane.f32.xlu0 %v1560
        %v1562 = vpop.xlane.xlu0 %1561
        %v1563 = vsel %vm1472, %v222, -inf
        %1564 = vmax.xlane.f32.xlu0 %v1563
        %v1565 = vpop.xlane.xlu0 %1564
        %v1566 = vsel %vm1472, %v223, -inf
        %1567 = vmax.xlane.f32.xlu0 %v1566
        %v1568 = vpop.xlane.xlu0 %1567
        %vm1569 = vcmp.lt.s32.totalorder %v666, 11
        %vm1570 = vmand %vm763, %vm1569
        %v1571 = vsel %vm1570, 1, 0
        %vm1572 = vcmp.eq.s32.totalorder %v1571, 1
        %v1605 = vperm.slane %v1281, %v354
        %v1606 = vperm.slane %v1284, %v356
        %v1607 = vsel %vm358, %v1606, %v1605
        %v1608 = vperm.slane %v1287, %v360
        %v1609 = vsel %vm362, %v1608, %v1607
        %v1610 = vperm.slane %v1290, %v364
        %v1611 = vsel %vm366, %v1610, %v1609
        %v1612 = vperm.slane %v1293, %v354
        %v1613 = vperm.slane %v1296, %v356
        %v1614 = vsel %vm358, %v1613, %v1612
        %v1615 = vperm.slane %v1299, %v360
        %v1616 = vsel %vm362, %v1615, %v1614
        %v1617 = vperm.slane %v1302, %v364
        %v1618 = vsel %vm366, %v1617, %v1616
        %v1619 = vperm.slane %v1305, %v354
        %v1620 = vperm.slane %v1308, %v356
        %v1621 = vsel %vm358, %v1620, %v1619
        %v1622 = vperm.slane %v1311, %v360
        %v1623 = vsel %vm362, %v1622, %v1621
        %v1624 = vperm.slane %v1314, %v364
        %v1625 = vsel %vm366, %v1624, %v1623
        %v1626 = vperm.slane %v1317, %v354
        %v1627 = vperm.slane %v1320, %v356
        %v1628 = vsel %vm358, %v1627, %v1626
        %v1629 = vperm.slane %v1323, %v360
        %v1630 = vsel %vm362, %v1629, %v1628
        %v1631 = vperm.slane %v1326, %v364
        %v1632 = vsel %vm366, %v1631, %v1630
        %v1633 = vperm.slane %v1329, %v354
        %v1634 = vperm.slane %v1332, %v356
        %v1635 = vsel %vm358, %v1634, %v1633
        %v1636 = vperm.slane %v1335, %v360
        %v1637 = vsel %vm362, %v1636, %v1635
        %v1638 = vperm.slane %v1338, %v364
        %v1639 = vsel %vm366, %v1638, %v1637
        %v1640 = vperm.slane %v1341, %v354
        %v1641 = vperm.slane %v1344, %v356
        %v1642 = vsel %vm358, %v1641, %v1640
        %v1643 = vperm.slane %v1347, %v360
        %v1644 = vsel %vm362, %v1643, %v1642
        %v1645 = vperm.slane %v1350, %v364
        %v1646 = vsel %vm366, %v1645, %v1644
        %v1647 = vperm.slane %v1353, %v354
        %v1648 = vperm.slane %v1356, %v356
        %v1649 = vsel %vm358, %v1648, %v1647
        %v1650 = vperm.slane %v1359, %v360
        %v1651 = vsel %vm362, %v1650, %v1649
        %v1652 = vperm.slane %v1362, %v364
        %v1653 = vsel %vm366, %v1652, %v1651
        %v1654 = vperm.slane %v1365, %v354
        %v1655 = vperm.slane %v1368, %v356
        %v1656 = vsel %vm358, %v1655, %v1654
        %v1657 = vperm.slane %v1371, %v360
        %v1658 = vsel %vm362, %v1657, %v1656
        %v1659 = vperm.slane %v1374, %v364
        %v1660 = vsel %vm366, %v1659, %v1658
        %v1661 = vsel %vm417, %v1618, %v1611
        %v1662 = vsel %vm419, %v1625, %v1661
        %v1663 = vsel %vm421, %v1632, %v1662
        %v1664 = vsel %vm423, %v1639, %v1663
        %v1665 = vsel %vm425, %v1646, %v1664
        %v1666 = vsel %vm427, %v1653, %v1665
        %v1667 = vsel %vm429, %v1660, %v1666
        %v1669 = vsel %vm1572, %v1667, -inf
        %v1670 = vsel %vm224, %v1669, -inf
        %1671 = vmax.xlane.f32.xlu0 %v1670
        %v1672 = vpop.xlane.xlu0 %1671
        %v1705 = vperm.slane %v1378, %v354
        %v1706 = vperm.slane %v1381, %v356
        %v1707 = vsel %vm358, %v1706, %v1705
        %v1708 = vperm.slane %v1384, %v360
        %v1709 = vsel %vm362, %v1708, %v1707
        %v1710 = vperm.slane %v1387, %v364
        %v1711 = vsel %vm366, %v1710, %v1709
        %v1712 = vperm.slane %v1390, %v354
        %v1713 = vperm.slane %v1393, %v356
        %v1714 = vsel %vm358, %v1713, %v1712
        %v1715 = vperm.slane %v1396, %v360
        %v1716 = vsel %vm362, %v1715, %v1714
        %v1717 = vperm.slane %v1399, %v364
        %v1718 = vsel %vm366, %v1717, %v1716
        %v1719 = vperm.slane %v1402, %v354
        %v1720 = vperm.slane %v1405, %v356
        %v1721 = vsel %vm358, %v1720, %v1719
        %v1722 = vperm.slane %v1408, %v360
        %v1723 = vsel %vm362, %v1722, %v1721
        %v1724 = vperm.slane %v1411, %v364
        %v1725 = vsel %vm366, %v1724, %v1723
        %v1726 = vperm.slane %v1414, %v354
        %v1727 = vperm.slane %v1417, %v356
        %v1728 = vsel %vm358, %v1727, %v1726
        %v1729 = vperm.slane %v1420, %v360
        %v1730 = vsel %vm362, %v1729, %v1728
        %v1731 = vperm.slane %v1423, %v364
        %v1732 = vsel %vm366, %v1731, %v1730
        %v1733 = vperm.slane %v1426, %v354
        %v1734 = vperm.slane %v1429, %v356
        %v1735 = vsel %vm358, %v1734, %v1733
        %v1736 = vperm.slane %v1432, %v360
        %v1737 = vsel %vm362, %v1736, %v1735
        %v1738 = vperm.slane %v1435, %v364
        %v1739 = vsel %vm366, %v1738, %v1737
        %v1740 = vperm.slane %v1438, %v354
        %v1741 = vperm.slane %v1441, %v356
        %v1742 = vsel %vm358, %v1741, %v1740
        %v1743 = vperm.slane %v1444, %v360
        %v1744 = vsel %vm362, %v1743, %v1742
        %v1745 = vperm.slane %v1447, %v364
        %v1746 = vsel %vm366, %v1745, %v1744
        %v1747 = vperm.slane %v1450, %v354
        %v1748 = vperm.slane %v1453, %v356
        %v1749 = vsel %vm358, %v1748, %v1747
        %v1750 = vperm.slane %v1456, %v360
        %v1751 = vsel %vm362, %v1750, %v1749
        %v1752 = vperm.slane %v1459, %v364
        %v1753 = vsel %vm366, %v1752, %v1751
        %v1754 = vperm.slane %v1462, %v354
        %v1755 = vperm.slane %v1465, %v356
        %v1756 = vsel %vm358, %v1755, %v1754
        %v1757 = vperm.slane %v1468, %v360
        %v1758 = vsel %vm362, %v1757, %v1756
        %v1759 = vperm.slane %v1471, %v364
        %v1760 = vsel %vm366, %v1759, %v1758
        %v1761 = vsel %vm417, %v1718, %v1711
        %v1762 = vsel %vm419, %v1725, %v1761
        %v1763 = vsel %vm421, %v1732, %v1762
        %v1764 = vsel %vm423, %v1739, %v1763
        %v1765 = vsel %vm425, %v1746, %v1764
        %v1766 = vsel %vm427, %v1753, %v1765
        %v1767 = vsel %vm429, %v1760, %v1766
        %v1769 = vsel %vm1572, %v1767, -inf
        %v1770 = vsel %vm224, %v1769, -inf
        %1771 = vmax.xlane.f32.xlu0 %v1770
        %v1772 = vpop.xlane.xlu0 %1771
        %v1805 = vperm.slane %v1475, %v354
        %v1806 = vperm.slane %v1478, %v356
        %v1807 = vsel %vm358, %v1806, %v1805
        %v1808 = vperm.slane %v1481, %v360
        %v1809 = vsel %vm362, %v1808, %v1807
        %v1810 = vperm.slane %v1484, %v364
        %v1811 = vsel %vm366, %v1810, %v1809
        %v1812 = vperm.slane %v1487, %v354
        %v1813 = vperm.slane %v1490, %v356
        %v1814 = vsel %vm358, %v1813, %v1812
        %v1815 = vperm.slane %v1493, %v360
        %v1816 = vsel %vm362, %v1815, %v1814
        %v1817 = vperm.slane %v1496, %v364
        %v1818 = vsel %vm366, %v1817, %v1816
        %v1819 = vperm.slane %v1499, %v354
        %v1820 = vperm.slane %v1502, %v356
        %v1821 = vsel %vm358, %v1820, %v1819
        %v1822 = vperm.slane %v1505, %v360
        %v1823 = vsel %vm362, %v1822, %v1821
        %v1824 = vperm.slane %v1508, %v364
        %v1825 = vsel %vm366, %v1824, %v1823
        %v1826 = vperm.slane %v1511, %v354
        %v1827 = vperm.slane %v1514, %v356
        %v1828 = vsel %vm358, %v1827, %v1826
        %v1829 = vperm.slane %v1517, %v360
        %v1830 = vsel %vm362, %v1829, %v1828
        %v1831 = vperm.slane %v1520, %v364
        %v1832 = vsel %vm366, %v1831, %v1830
        %v1833 = vperm.slane %v1523, %v354
        %v1834 = vperm.slane %v1526, %v356
        %v1835 = vsel %vm358, %v1834, %v1833
        %v1836 = vperm.slane %v1529, %v360
        %v1837 = vsel %vm362, %v1836, %v1835
        %v1838 = vperm.slane %v1532, %v364
        %v1839 = vsel %vm366, %v1838, %v1837
        %v1840 = vperm.slane %v1535, %v354
        %v1841 = vperm.slane %v1538, %v356
        %v1842 = vsel %vm358, %v1841, %v1840
        %v1843 = vperm.slane %v1541, %v360
        %v1844 = vsel %vm362, %v1843, %v1842
        %v1845 = vperm.slane %v1544, %v364
        %v1846 = vsel %vm366, %v1845, %v1844
        %v1847 = vperm.slane %v1547, %v354
        %v1848 = vperm.slane %v1550, %v356
        %v1849 = vsel %vm358, %v1848, %v1847
        %v1850 = vperm.slane %v1553, %v360
        %v1851 = vsel %vm362, %v1850, %v1849
        %v1852 = vperm.slane %v1556, %v364
        %v1853 = vsel %vm366, %v1852, %v1851
        %v1854 = vperm.slane %v1559, %v354
        %v1855 = vperm.slane %v1562, %v356
        %v1856 = vsel %vm358, %v1855, %v1854
        %v1857 = vperm.slane %v1565, %v360
        %v1858 = vsel %vm362, %v1857, %v1856
        %v1859 = vperm.slane %v1568, %v364
        %v1860 = vsel %vm366, %v1859, %v1858
        %v1861 = vsel %vm417, %v1818, %v1811
        %v1862 = vsel %vm419, %v1825, %v1861
        %v1863 = vsel %vm421, %v1832, %v1862
        %v1864 = vsel %vm423, %v1839, %v1863
        %v1865 = vsel %vm425, %v1846, %v1864
        %v1866 = vsel %vm427, %v1853, %v1865
        %v1867 = vsel %vm429, %v1860, %v1866
        %v1869 = vsel %vm1572, %v1867, -inf
        %v1870 = vsel %vm224, %v1869, -inf
        %1871 = vmax.xlane.f32.xlu0 %v1870
        %v1872 = vpop.xlane.xlu0 %1871
        %vm1873 = vcmp.ge.s32.totalorder %v666, 10
        %vm1874 = vcmp.lt.s32.totalorder %v666, 22
        %vm1875 = vmand %vm1873, %vm1874
        %v1876 = vsel %vm1875, 1, 0
        %vm1877 = vcmp.eq.s32.totalorder %v1876, 1
        %v1878 = vsel %vm1877, %v1667, -inf
        %v1879 = vsel %vm224, %v1878, -inf
        %1880 = vmax.xlane.f32.xlu0 %v1879
        %v1881 = vpop.xlane.xlu0 %1880
        %v1882 = vsel %vm1877, %v1767, -inf
        %v1883 = vsel %vm224, %v1882, -inf
        %1884 = vmax.xlane.f32.xlu0 %v1883
        %v1885 = vpop.xlane.xlu0 %1884
        %v1886 = vsel %vm1877, %v1867, -inf
        %v1887 = vsel %vm224, %v1886, -inf
        %1888 = vmax.xlane.f32.xlu0 %v1887
        %v1889 = vpop.xlane.xlu0 %1888
        %vm1890 = vcmp.ge.s32.totalorder %v666, 21
        %vm1891 = vmand %vm1890, %vm764
        %v1892 = vsel %vm1891, 1, 0
        %vm1893 = vcmp.eq.s32.totalorder %v1892, 1
        %v1894 = vsel %vm1893, %v1667, -inf
        %v1895 = vsel %vm224, %v1894, -inf
        %1896 = vmax.xlane.f32.xlu0 %v1895
        %v1897 = vpop.xlane.xlu0 %1896
        %v1898 = vsel %vm1893, %v1767, -inf
        %v1899 = vsel %vm224, %v1898, -inf
        %1900 = vmax.xlane.f32.xlu0 %v1899
        %v1901 = vpop.xlane.xlu0 %1900
        %v1902 = vsel %vm1893, %v1867, -inf
        %v1903 = vsel %vm224, %v1902, -inf
        %1904 = vmax.xlane.f32.xlu0 %v1903
        %v1905 = vpop.xlane.xlu0 %1904
        %vm1906 = vcmask 64512
        %v1907 = vsel %vm1906, %v192, -inf
        %1908 = vmax.xlane.f32.xlu0 %v1907
        %v1909 = vpop.xlane.xlu0 %1908
        %v1910 = vsel %vm1906, %v193, -inf
        %1911 = vmax.xlane.f32.xlu0 %v1910
        %v1912 = vpop.xlane.xlu0 %1911
        %v1913 = vsel %vm1906, %v194, -inf
        %1914 = vmax.xlane.f32.xlu0 %v1913
        %v1915 = vpop.xlane.xlu0 %1914
        %v1916 = vsel %vm1906, %v195, -inf
        %1917 = vmax.xlane.f32.xlu0 %v1916
        %v1918 = vpop.xlane.xlu0 %1917
        %v1919 = vsel %vm1906, %v196, -inf
        %1920 = vmax.xlane.f32.xlu0 %v1919
        %v1921 = vpop.xlane.xlu0 %1920
        %v1922 = vsel %vm1906, %v197, -inf
        %1923 = vmax.xlane.f32.xlu0 %v1922
        %v1924 = vpop.xlane.xlu0 %1923
        %v1925 = vsel %vm1906, %v198, -inf
        %1926 = vmax.xlane.f32.xlu0 %v1925
        %v1927 = vpop.xlane.xlu0 %1926
        %v1928 = vsel %vm1906, %v199, -inf
        %1929 = vmax.xlane.f32.xlu0 %v1928
        %v1930 = vpop.xlane.xlu0 %1929
        %v1931 = vsel %vm1906, %v200, -inf
        %1932 = vmax.xlane.f32.xlu0 %v1931
        %v1933 = vpop.xlane.xlu0 %1932
        %v1934 = vsel %vm1906, %v201, -inf
        %1935 = vmax.xlane.f32.xlu0 %v1934
        %v1936 = vpop.xlane.xlu0 %1935
        %v1937 = vsel %vm1906, %v202, -inf
        %1938 = vmax.xlane.f32.xlu0 %v1937
        %v1939 = vpop.xlane.xlu0 %1938
        %v1940 = vsel %vm1906, %v203, -inf
        %1941 = vmax.xlane.f32.xlu0 %v1940
        %v1942 = vpop.xlane.xlu0 %1941
        %v1943 = vsel %vm1906, %v204, -inf
        %1944 = vmax.xlane.f32.xlu0 %v1943
        %v1945 = vpop.xlane.xlu0 %1944
        %v1946 = vsel %vm1906, %v205, -inf
        %1947 = vmax.xlane.f32.xlu0 %v1946
        %v1948 = vpop.xlane.xlu0 %1947
        %v1949 = vsel %vm1906, %v206, -inf
        %1950 = vmax.xlane.f32.xlu0 %v1949
        %v1951 = vpop.xlane.xlu0 %1950
        %v1952 = vsel %vm1906, %v207, -inf
        %1953 = vmax.xlane.f32.xlu0 %v1952
        %v1954 = vpop.xlane.xlu0 %1953
        %v1955 = vsel %vm1906, %v208, -inf
        %1956 = vmax.xlane.f32.xlu0 %v1955
        %v1957 = vpop.xlane.xlu0 %1956
        %v1958 = vsel %vm1906, %v209, -inf
        %1959 = vmax.xlane.f32.xlu0 %v1958
        %v1960 = vpop.xlane.xlu0 %1959
        %v1961 = vsel %vm1906, %v210, -inf
        %1962 = vmax.xlane.f32.xlu0 %v1961
        %v1963 = vpop.xlane.xlu0 %1962
        %v1964 = vsel %vm1906, %v211, -inf
        %1965 = vmax.xlane.f32.xlu0 %v1964
        %v1966 = vpop.xlane.xlu0 %1965
        %v1967 = vsel %vm1906, %v212, -inf
        %1968 = vmax.xlane.f32.xlu0 %v1967
        %v1969 = vpop.xlane.xlu0 %1968
        %v1970 = vsel %vm1906, %v213, -inf
        %1971 = vmax.xlane.f32.xlu0 %v1970
        %v1972 = vpop.xlane.xlu0 %1971
        %v1973 = vsel %vm1906, %v214, -inf
        %1974 = vmax.xlane.f32.xlu0 %v1973
        %v1975 = vpop.xlane.xlu0 %1974
        %v1976 = vsel %vm1906, %v215, -inf
        %1977 = vmax.xlane.f32.xlu0 %v1976
        %v1978 = vpop.xlane.xlu0 %1977
        %v1979 = vsel %vm1906, %v216, -inf
        %1980 = vmax.xlane.f32.xlu0 %v1979
        %v1981 = vpop.xlane.xlu0 %1980
        %v1982 = vsel %vm1906, %v217, -inf
        %1983 = vmax.xlane.f32.xlu0 %v1982
        %v1984 = vpop.xlane.xlu0 %1983
        %v1985 = vsel %vm1906, %v218, -inf
        %1986 = vmax.xlane.f32.xlu0 %v1985
        %v1987 = vpop.xlane.xlu0 %1986
        %v1988 = vsel %vm1906, %v219, -inf
        %1989 = vmax.xlane.f32.xlu0 %v1988
        %v1990 = vpop.xlane.xlu0 %1989
        %v1991 = vsel %vm1906, %v220, -inf
        %1992 = vmax.xlane.f32.xlu0 %v1991
        %v1993 = vpop.xlane.xlu0 %1992
        %v1994 = vsel %vm1906, %v221, -inf
        %1995 = vmax.xlane.f32.xlu0 %v1994
        %v1996 = vpop.xlane.xlu0 %1995
        %v1997 = vsel %vm1906, %v222, -inf
        %1998 = vmax.xlane.f32.xlu0 %v1997
        %v1999 = vpop.xlane.xlu0 %1998
        %v2000 = vsel %vm1906, %v223, -inf
        %2001 = vmax.xlane.f32.xlu0 %v2000
        %v2002 = vpop.xlane.xlu0 %2001
        %v2003 = vsel %vm358, %v192, -inf
        %2004 = vmax.xlane.f32.xlu0 %v2003
        %v2005 = vpop.xlane.xlu0 %2004
        %v2006 = vsel %vm358, %v193, -inf
        %2007 = vmax.xlane.f32.xlu0 %v2006
        %v2008 = vpop.xlane.xlu0 %2007
        %v2009 = vsel %vm358, %v194, -inf
        %2010 = vmax.xlane.f32.xlu0 %v2009
        %v2011 = vpop.xlane.xlu0 %2010
        %v2012 = vsel %vm358, %v195, -inf
        %2013 = vmax.xlane.f32.xlu0 %v2012
        %v2014 = vpop.xlane.xlu0 %2013
        %v2015 = vsel %vm358, %v196, -inf
        %2016 = vmax.xlane.f32.xlu0 %v2015
        %v2017 = vpop.xlane.xlu0 %2016
        %v2018 = vsel %vm358, %v197, -inf
        %2019 = vmax.xlane.f32.xlu0 %v2018
        %v2020 = vpop.xlane.xlu0 %2019
        %v2021 = vsel %vm358, %v198, -inf
        %2022 = vmax.xlane.f32.xlu0 %v2021
        %v2023 = vpop.xlane.xlu0 %2022
        %v2024 = vsel %vm358, %v199, -inf
        %2025 = vmax.xlane.f32.xlu0 %v2024
        %v2026 = vpop.xlane.xlu0 %2025
        %v2027 = vsel %vm358, %v200, -inf
        %2028 = vmax.xlane.f32.xlu0 %v2027
        %v2029 = vpop.xlane.xlu0 %2028
        %v2030 = vsel %vm358, %v201, -inf
        %2031 = vmax.xlane.f32.xlu0 %v2030
        %v2032 = vpop.xlane.xlu0 %2031
        %v2033 = vsel %vm358, %v202, -inf
        %2034 = vmax.xlane.f32.xlu0 %v2033
        %v2035 = vpop.xlane.xlu0 %2034
        %v2036 = vsel %vm358, %v203, -inf
        %2037 = vmax.xlane.f32.xlu0 %v2036
        %v2038 = vpop.xlane.xlu0 %2037
        %v2039 = vsel %vm358, %v204, -inf
        %2040 = vmax.xlane.f32.xlu0 %v2039
        %v2041 = vpop.xlane.xlu0 %2040
        %v2042 = vsel %vm358, %v205, -inf
        %2043 = vmax.xlane.f32.xlu0 %v2042
        %v2044 = vpop.xlane.xlu0 %2043
        %v2045 = vsel %vm358, %v206, -inf
        %2046 = vmax.xlane.f32.xlu0 %v2045
        %v2047 = vpop.xlane.xlu0 %2046
        %v2048 = vsel %vm358, %v207, -inf
        %2049 = vmax.xlane.f32.xlu0 %v2048
        %v2050 = vpop.xlane.xlu0 %2049
        %v2051 = vsel %vm358, %v208, -inf
        %2052 = vmax.xlane.f32.xlu0 %v2051
        %v2053 = vpop.xlane.xlu0 %2052
        %v2054 = vsel %vm358, %v209, -inf
        %2055 = vmax.xlane.f32.xlu0 %v2054
        %v2056 = vpop.xlane.xlu0 %2055
        %v2057 = vsel %vm358, %v210, -inf
        %2058 = vmax.xlane.f32.xlu0 %v2057
        %v2059 = vpop.xlane.xlu0 %2058
        %v2060 = vsel %vm358, %v211, -inf
        %2061 = vmax.xlane.f32.xlu0 %v2060
        %v2062 = vpop.xlane.xlu0 %2061
        %v2063 = vsel %vm358, %v212, -inf
        %2064 = vmax.xlane.f32.xlu0 %v2063
        %v2065 = vpop.xlane.xlu0 %2064
        %v2066 = vsel %vm358, %v213, -inf
        %2067 = vmax.xlane.f32.xlu0 %v2066
        %v2068 = vpop.xlane.xlu0 %2067
        %v2069 = vsel %vm358, %v214, -inf
        %2070 = vmax.xlane.f32.xlu0 %v2069
        %v2071 = vpop.xlane.xlu0 %2070
        %v2072 = vsel %vm358, %v215, -inf
        %2073 = vmax.xlane.f32.xlu0 %v2072
        %v2074 = vpop.xlane.xlu0 %2073
        %v2075 = vsel %vm358, %v216, -inf
        %2076 = vmax.xlane.f32.xlu0 %v2075
        %v2077 = vpop.xlane.xlu0 %2076
        %v2078 = vsel %vm358, %v217, -inf
        %2079 = vmax.xlane.f32.xlu0 %v2078
        %v2080 = vpop.xlane.xlu0 %2079
        %v2081 = vsel %vm358, %v218, -inf
        %2082 = vmax.xlane.f32.xlu0 %v2081
        %v2083 = vpop.xlane.xlu0 %2082
        %v2084 = vsel %vm358, %v219, -inf
        %2085 = vmax.xlane.f32.xlu0 %v2084
        %v2086 = vpop.xlane.xlu0 %2085
        %v2087 = vsel %vm358, %v220, -inf
        %2088 = vmax.xlane.f32.xlu0 %v2087
        %v2089 = vpop.xlane.xlu0 %2088
        %v2090 = vsel %vm358, %v221, -inf
        %2091 = vmax.xlane.f32.xlu0 %v2090
        %v2092 = vpop.xlane.xlu0 %2091
        %v2093 = vsel %vm358, %v222, -inf
        %2094 = vmax.xlane.f32.xlu0 %v2093
        %v2095 = vpop.xlane.xlu0 %2094
        %v2096 = vsel %vm358, %v223, -inf
        %2097 = vmax.xlane.f32.xlu0 %v2096
        %v2098 = vpop.xlane.xlu0 %2097
        %v2099 = vsel %vm362, %v192, -inf
        %2100 = vmax.xlane.f32.xlu0 %v2099
        %v2101 = vpop.xlane.xlu0 %2100
        %v2102 = vsel %vm362, %v193, -inf
        %2103 = vmax.xlane.f32.xlu0 %v2102
        %v2104 = vpop.xlane.xlu0 %2103
        %v2105 = vsel %vm362, %v194, -inf
        %2106 = vmax.xlane.f32.xlu0 %v2105
        %v2107 = vpop.xlane.xlu0 %2106
        %v2108 = vsel %vm362, %v195, -inf
        %2109 = vmax.xlane.f32.xlu0 %v2108
        %v2110 = vpop.xlane.xlu0 %2109
        %v2111 = vsel %vm362, %v196, -inf
        %2112 = vmax.xlane.f32.xlu0 %v2111
        %v2113 = vpop.xlane.xlu0 %2112
        %v2114 = vsel %vm362, %v197, -inf
        %2115 = vmax.xlane.f32.xlu0 %v2114
        %v2116 = vpop.xlane.xlu0 %2115
        %v2117 = vsel %vm362, %v198, -inf
        %2118 = vmax.xlane.f32.xlu0 %v2117
        %v2119 = vpop.xlane.xlu0 %2118
        %v2120 = vsel %vm362, %v199, -inf
        %2121 = vmax.xlane.f32.xlu0 %v2120
        %v2122 = vpop.xlane.xlu0 %2121
        %v2123 = vsel %vm362, %v200, -inf
        %2124 = vmax.xlane.f32.xlu0 %v2123
        %v2125 = vpop.xlane.xlu0 %2124
        %v2126 = vsel %vm362, %v201, -inf
        %2127 = vmax.xlane.f32.xlu0 %v2126
        %v2128 = vpop.xlane.xlu0 %2127
        %v2129 = vsel %vm362, %v202, -inf
        %2130 = vmax.xlane.f32.xlu0 %v2129
        %v2131 = vpop.xlane.xlu0 %2130
        %v2132 = vsel %vm362, %v203, -inf
        %2133 = vmax.xlane.f32.xlu0 %v2132
        %v2134 = vpop.xlane.xlu0 %2133
        %v2135 = vsel %vm362, %v204, -inf
        %2136 = vmax.xlane.f32.xlu0 %v2135
        %v2137 = vpop.xlane.xlu0 %2136
        %v2138 = vsel %vm362, %v205, -inf
        %2139 = vmax.xlane.f32.xlu0 %v2138
        %v2140 = vpop.xlane.xlu0 %2139
        %v2141 = vsel %vm362, %v206, -inf
        %2142 = vmax.xlane.f32.xlu0 %v2141
        %v2143 = vpop.xlane.xlu0 %2142
        %v2144 = vsel %vm362, %v207, -inf
        %2145 = vmax.xlane.f32.xlu0 %v2144
        %v2146 = vpop.xlane.xlu0 %2145
        %v2147 = vsel %vm362, %v208, -inf
        %2148 = vmax.xlane.f32.xlu0 %v2147
        %v2149 = vpop.xlane.xlu0 %2148
        %v2150 = vsel %vm362, %v209, -inf
        %2151 = vmax.xlane.f32.xlu0 %v2150
        %v2152 = vpop.xlane.xlu0 %2151
        %v2153 = vsel %vm362, %v210, -inf
        %2154 = vmax.xlane.f32.xlu0 %v2153
        %v2155 = vpop.xlane.xlu0 %2154
        %v2156 = vsel %vm362, %v211, -inf
        %2157 = vmax.xlane.f32.xlu0 %v2156
        %v2158 = vpop.xlane.xlu0 %2157
        %v2159 = vsel %vm362, %v212, -inf
        %2160 = vmax.xlane.f32.xlu0 %v2159
        %v2161 = vpop.xlane.xlu0 %2160
        %v2162 = vsel %vm362, %v213, -inf
        %2163 = vmax.xlane.f32.xlu0 %v2162
        %v2164 = vpop.xlane.xlu0 %2163
        %v2165 = vsel %vm362, %v214, -inf
        %2166 = vmax.xlane.f32.xlu0 %v2165
        %v2167 = vpop.xlane.xlu0 %2166
        %v2168 = vsel %vm362, %v215, -inf
        %2169 = vmax.xlane.f32.xlu0 %v2168
        %v2170 = vpop.xlane.xlu0 %2169
        %v2171 = vsel %vm362, %v216, -inf
        %2172 = vmax.xlane.f32.xlu0 %v2171
        %v2173 = vpop.xlane.xlu0 %2172
        %v2174 = vsel %vm362, %v217, -inf
        %2175 = vmax.xlane.f32.xlu0 %v2174
        %v2176 = vpop.xlane.xlu0 %2175
        %v2177 = vsel %vm362, %v218, -inf
        %2178 = vmax.xlane.f32.xlu0 %v2177
        %v2179 = vpop.xlane.xlu0 %2178
        %v2180 = vsel %vm362, %v219, -inf
        %2181 = vmax.xlane.f32.xlu0 %v2180
        %v2182 = vpop.xlane.xlu0 %2181
        %v2183 = vsel %vm362, %v220, -inf
        %2184 = vmax.xlane.f32.xlu0 %v2183
        %v2185 = vpop.xlane.xlu0 %2184
        %v2186 = vsel %vm362, %v221, -inf
        %2187 = vmax.xlane.f32.xlu0 %v2186
        %v2188 = vpop.xlane.xlu0 %2187
        %v2189 = vsel %vm362, %v222, -inf
        %2190 = vmax.xlane.f32.xlu0 %v2189
        %v2191 = vpop.xlane.xlu0 %2190
        %v2192 = vsel %vm362, %v223, -inf
        %2193 = vmax.xlane.f32.xlu0 %v2192
        %v2194 = vpop.xlane.xlu0 %2193
        %v2195 = vsel %vm366, %v192, -inf
        %2196 = vmax.xlane.f32.xlu0 %v2195
        %v2197 = vpop.xlane.xlu0 %2196
        %v2198 = vsel %vm366, %v193, -inf
        %2199 = vmax.xlane.f32.xlu0 %v2198
        %v2200 = vpop.xlane.xlu0 %2199
        %v2201 = vsel %vm366, %v194, -inf
        %2202 = vmax.xlane.f32.xlu0 %v2201
        %v2203 = vpop.xlane.xlu0 %2202
        %v2204 = vsel %vm366, %v195, -inf
        %2205 = vmax.xlane.f32.xlu0 %v2204
        %v2206 = vpop.xlane.xlu0 %2205
        %v2207 = vsel %vm366, %v196, -inf
        %2208 = vmax.xlane.f32.xlu0 %v2207
        %v2209 = vpop.xlane.xlu0 %2208
        %v2210 = vsel %vm366, %v197, -inf
        %2211 = vmax.xlane.f32.xlu0 %v2210
        %v2212 = vpop.xlane.xlu0 %2211
        %v2213 = vsel %vm366, %v198, -inf
        %2214 = vmax.xlane.f32.xlu0 %v2213
        %v2215 = vpop.xlane.xlu0 %2214
        %v2216 = vsel %vm366, %v199, -inf
        %2217 = vmax.xlane.f32.xlu0 %v2216
        %v2218 = vpop.xlane.xlu0 %2217
        %v2219 = vsel %vm366, %v200, -inf
        %2220 = vmax.xlane.f32.xlu0 %v2219
        %v2221 = vpop.xlane.xlu0 %2220
        %v2222 = vsel %vm366, %v201, -inf
        %2223 = vmax.xlane.f32.xlu0 %v2222
        %v2224 = vpop.xlane.xlu0 %2223
        %v2225 = vsel %vm366, %v202, -inf
        %2226 = vmax.xlane.f32.xlu0 %v2225
        %v2227 = vpop.xlane.xlu0 %2226
        %v2228 = vsel %vm366, %v203, -inf
        %2229 = vmax.xlane.f32.xlu0 %v2228
        %v2230 = vpop.xlane.xlu0 %2229
        %v2231 = vsel %vm366, %v204, -inf
        %2232 = vmax.xlane.f32.xlu0 %v2231
        %v2233 = vpop.xlane.xlu0 %2232
        %v2234 = vsel %vm366, %v205, -inf
        %2235 = vmax.xlane.f32.xlu0 %v2234
        %v2236 = vpop.xlane.xlu0 %2235
        %v2237 = vsel %vm366, %v206, -inf
        %2238 = vmax.xlane.f32.xlu0 %v2237
        %v2239 = vpop.xlane.xlu0 %2238
        %v2240 = vsel %vm366, %v207, -inf
        %2241 = vmax.xlane.f32.xlu0 %v2240
        %v2242 = vpop.xlane.xlu0 %2241
        %v2243 = vsel %vm366, %v208, -inf
        %2244 = vmax.xlane.f32.xlu0 %v2243
        %v2245 = vpop.xlane.xlu0 %2244
        %v2246 = vsel %vm366, %v209, -inf
        %2247 = vmax.xlane.f32.xlu0 %v2246
        %v2248 = vpop.xlane.xlu0 %2247
        %v2249 = vsel %vm366, %v210, -inf
        %2250 = vmax.xlane.f32.xlu0 %v2249
        %v2251 = vpop.xlane.xlu0 %2250
        %v2252 = vsel %vm366, %v211, -inf
        %2253 = vmax.xlane.f32.xlu0 %v2252
        %v2254 = vpop.xlane.xlu0 %2253
        %v2255 = vsel %vm366, %v212, -inf
        %2256 = vmax.xlane.f32.xlu0 %v2255
        %v2257 = vpop.xlane.xlu0 %2256
        %v2258 = vsel %vm366, %v213, -inf
        %2259 = vmax.xlane.f32.xlu0 %v2258
        %v2260 = vpop.xlane.xlu0 %2259
        %v2261 = vsel %vm366, %v214, -inf
        %2262 = vmax.xlane.f32.xlu0 %v2261
        %v2263 = vpop.xlane.xlu0 %2262
        %v2264 = vsel %vm366, %v215, -inf
        %2265 = vmax.xlane.f32.xlu0 %v2264
        %v2266 = vpop.xlane.xlu0 %2265
        %v2267 = vsel %vm366, %v216, -inf
        %2268 = vmax.xlane.f32.xlu0 %v2267
        %v2269 = vpop.xlane.xlu0 %2268
        %v2270 = vsel %vm366, %v217, -inf
        %2271 = vmax.xlane.f32.xlu0 %v2270
        %v2272 = vpop.xlane.xlu0 %2271
        %v2273 = vsel %vm366, %v218, -inf
        %2274 = vmax.xlane.f32.xlu0 %v2273
        %v2275 = vpop.xlane.xlu0 %2274
        %v2276 = vsel %vm366, %v219, -inf
        %2277 = vmax.xlane.f32.xlu0 %v2276
        %v2278 = vpop.xlane.xlu0 %2277
        %v2279 = vsel %vm366, %v220, -inf
        %2280 = vmax.xlane.f32.xlu0 %v2279
        %v2281 = vpop.xlane.xlu0 %2280
        %v2282 = vsel %vm366, %v221, -inf
        %2283 = vmax.xlane.f32.xlu0 %v2282
        %v2284 = vpop.xlane.xlu0 %2283
        %v2285 = vsel %vm366, %v222, -inf
        %2286 = vmax.xlane.f32.xlu0 %v2285
        %v2287 = vpop.xlane.xlu0 %2286
        %v2288 = vsel %vm366, %v223, -inf
        %2289 = vmax.xlane.f32.xlu0 %v2288
        %v2290 = vpop.xlane.xlu0 %2289
        %vm2291 = vcmp.lt.s32.totalorder %v666, 8
        %vm2292 = vmand %vm763, %vm2291
        %v2293 = vsel %vm2292, 1, 0
        %vm2294 = vcmp.eq.s32.totalorder %v2293, 1
        %v2327 = vperm.slane %v1909, %v354
        %v2328 = vperm.slane %v1912, %v356
        %v2329 = vsel %vm358, %v2328, %v2327
        %v2330 = vperm.slane %v1915, %v360
        %v2331 = vsel %vm362, %v2330, %v2329
        %v2332 = vperm.slane %v1918, %v364
        %v2333 = vsel %vm366, %v2332, %v2331
        %v2334 = vperm.slane %v1921, %v354
        %v2335 = vperm.slane %v1924, %v356
        %v2336 = vsel %vm358, %v2335, %v2334
        %v2337 = vperm.slane %v1927, %v360
        %v2338 = vsel %vm362, %v2337, %v2336
        %v2339 = vperm.slane %v1930, %v364
        %v2340 = vsel %vm366, %v2339, %v2338
        %v2341 = vperm.slane %v1933, %v354
        %v2342 = vperm.slane %v1936, %v356
        %v2343 = vsel %vm358, %v2342, %v2341
        %v2344 = vperm.slane %v1939, %v360
        %v2345 = vsel %vm362, %v2344, %v2343
        %v2346 = vperm.slane %v1942, %v364
        %v2347 = vsel %vm366, %v2346, %v2345
        %v2348 = vperm.slane %v1945, %v354
        %v2349 = vperm.slane %v1948, %v356
        %v2350 = vsel %vm358, %v2349, %v2348
        %v2351 = vperm.slane %v1951, %v360
        %v2352 = vsel %vm362, %v2351, %v2350
        %v2353 = vperm.slane %v1954, %v364
        %v2354 = vsel %vm366, %v2353, %v2352
        %v2355 = vperm.slane %v1957, %v354
        %v2356 = vperm.slane %v1960, %v356
        %v2357 = vsel %vm358, %v2356, %v2355
        %v2358 = vperm.slane %v1963, %v360
        %v2359 = vsel %vm362, %v2358, %v2357
        %v2360 = vperm.slane %v1966, %v364
        %v2361 = vsel %vm366, %v2360, %v2359
        %v2362 = vperm.slane %v1969, %v354
        %v2363 = vperm.slane %v1972, %v356
        %v2364 = vsel %vm358, %v2363, %v2362
        %v2365 = vperm.slane %v1975, %v360
        %v2366 = vsel %vm362, %v2365, %v2364
        %v2367 = vperm.slane %v1978, %v364
        %v2368 = vsel %vm366, %v2367, %v2366
        %v2369 = vperm.slane %v1981, %v354
        %v2370 = vperm.slane %v1984, %v356
        %v2371 = vsel %vm358, %v2370, %v2369
        %v2372 = vperm.slane %v1987, %v360
        %v2373 = vsel %vm362, %v2372, %v2371
        %v2374 = vperm.slane %v1990, %v364
        %v2375 = vsel %vm366, %v2374, %v2373
        %v2376 = vperm.slane %v1993, %v354
        %v2377 = vperm.slane %v1996, %v356
        %v2378 = vsel %vm358, %v2377, %v2376
        %v2379 = vperm.slane %v1999, %v360
        %v2380 = vsel %vm362, %v2379, %v2378
        %v2381 = vperm.slane %v2002, %v364
        %v2382 = vsel %vm366, %v2381, %v2380
        %v2383 = vsel %vm417, %v2340, %v2333
        %v2384 = vsel %vm419, %v2347, %v2383
        %v2385 = vsel %vm421, %v2354, %v2384
        %v2386 = vsel %vm423, %v2361, %v2385
        %v2387 = vsel %vm425, %v2368, %v2386
        %v2388 = vsel %vm427, %v2375, %v2387
        %v2389 = vsel %vm429, %v2382, %v2388
        %v2391 = vsel %vm2294, %v2389, -inf
        %v2392 = vsel %vm224, %v2391, -inf
        %2393 = vmax.xlane.f32.xlu0 %v2392
        %v2394 = vpop.xlane.xlu0 %2393
        %v2427 = vperm.slane %v2005, %v354
        %v2428 = vperm.slane %v2008, %v356
        %v2429 = vsel %vm358, %v2428, %v2427
        %v2430 = vperm.slane %v2011, %v360
        %v2431 = vsel %vm362, %v2430, %v2429
        %v2432 = vperm.slane %v2014, %v364
        %v2433 = vsel %vm366, %v2432, %v2431
        %v2434 = vperm.slane %v2017, %v354
        %v2435 = vperm.slane %v2020, %v356
        %v2436 = vsel %vm358, %v2435, %v2434
        %v2437 = vperm.slane %v2023, %v360
        %v2438 = vsel %vm362, %v2437, %v2436
        %v2439 = vperm.slane %v2026, %v364
        %v2440 = vsel %vm366, %v2439, %v2438
        %v2441 = vperm.slane %v2029, %v354
        %v2442 = vperm.slane %v2032, %v356
        %v2443 = vsel %vm358, %v2442, %v2441
        %v2444 = vperm.slane %v2035, %v360
        %v2445 = vsel %vm362, %v2444, %v2443
        %v2446 = vperm.slane %v2038, %v364
        %v2447 = vsel %vm366, %v2446, %v2445
        %v2448 = vperm.slane %v2041, %v354
        %v2449 = vperm.slane %v2044, %v356
        %v2450 = vsel %vm358, %v2449, %v2448
        %v2451 = vperm.slane %v2047, %v360
        %v2452 = vsel %vm362, %v2451, %v2450
        %v2453 = vperm.slane %v2050, %v364
        %v2454 = vsel %vm366, %v2453, %v2452
        %v2455 = vperm.slane %v2053, %v354
        %v2456 = vperm.slane %v2056, %v356
        %v2457 = vsel %vm358, %v2456, %v2455
        %v2458 = vperm.slane %v2059, %v360
        %v2459 = vsel %vm362, %v2458, %v2457
        %v2460 = vperm.slane %v2062, %v364
        %v2461 = vsel %vm366, %v2460, %v2459
        %v2462 = vperm.slane %v2065, %v354
        %v2463 = vperm.slane %v2068, %v356
        %v2464 = vsel %vm358, %v2463, %v2462
        %v2465 = vperm.slane %v2071, %v360
        %v2466 = vsel %vm362, %v2465, %v2464
        %v2467 = vperm.slane %v2074, %v364
        %v2468 = vsel %vm366, %v2467, %v2466
        %v2469 = vperm.slane %v2077, %v354
        %v2470 = vperm.slane %v2080, %v356
        %v2471 = vsel %vm358, %v2470, %v2469
        %v2472 = vperm.slane %v2083, %v360
        %v2473 = vsel %vm362, %v2472, %v2471
        %v2474 = vperm.slane %v2086, %v364
        %v2475 = vsel %vm366, %v2474, %v2473
        %v2476 = vperm.slane %v2089, %v354
        %v2477 = vperm.slane %v2092, %v356
        %v2478 = vsel %vm358, %v2477, %v2476
        %v2479 = vperm.slane %v2095, %v360
        %v2480 = vsel %vm362, %v2479, %v2478
        %v2481 = vperm.slane %v2098, %v364
        %v2482 = vsel %vm366, %v2481, %v2480
        %v2483 = vsel %vm417, %v2440, %v2433
        %v2484 = vsel %vm419, %v2447, %v2483
        %v2485 = vsel %vm421, %v2454, %v2484
        %v2486 = vsel %vm423, %v2461, %v2485
        %v2487 = vsel %vm425, %v2468, %v2486
        %v2488 = vsel %vm427, %v2475, %v2487
        %v2489 = vsel %vm429, %v2482, %v2488
        %v2491 = vsel %vm2294, %v2489, -inf
        %v2492 = vsel %vm224, %v2491, -inf
        %2493 = vmax.xlane.f32.xlu0 %v2492
        %v2494 = vpop.xlane.xlu0 %2493
        %v2527 = vperm.slane %v2101, %v354
        %v2528 = vperm.slane %v2104, %v356
        %v2529 = vsel %vm358, %v2528, %v2527
        %v2530 = vperm.slane %v2107, %v360
        %v2531 = vsel %vm362, %v2530, %v2529
        %v2532 = vperm.slane %v2110, %v364
        %v2533 = vsel %vm366, %v2532, %v2531
        %v2534 = vperm.slane %v2113, %v354
        %v2535 = vperm.slane %v2116, %v356
        %v2536 = vsel %vm358, %v2535, %v2534
        %v2537 = vperm.slane %v2119, %v360
        %v2538 = vsel %vm362, %v2537, %v2536
        %v2539 = vperm.slane %v2122, %v364
        %v2540 = vsel %vm366, %v2539, %v2538
        %v2541 = vperm.slane %v2125, %v354
        %v2542 = vperm.slane %v2128, %v356
        %v2543 = vsel %vm358, %v2542, %v2541
        %v2544 = vperm.slane %v2131, %v360
        %v2545 = vsel %vm362, %v2544, %v2543
        %v2546 = vperm.slane %v2134, %v364
        %v2547 = vsel %vm366, %v2546, %v2545
        %v2548 = vperm.slane %v2137, %v354
        %v2549 = vperm.slane %v2140, %v356
        %v2550 = vsel %vm358, %v2549, %v2548
        %v2551 = vperm.slane %v2143, %v360
        %v2552 = vsel %vm362, %v2551, %v2550
        %v2553 = vperm.slane %v2146, %v364
        %v2554 = vsel %vm366, %v2553, %v2552
        %v2555 = vperm.slane %v2149, %v354
        %v2556 = vperm.slane %v2152, %v356
        %v2557 = vsel %vm358, %v2556, %v2555
        %v2558 = vperm.slane %v2155, %v360
        %v2559 = vsel %vm362, %v2558, %v2557
        %v2560 = vperm.slane %v2158, %v364
        %v2561 = vsel %vm366, %v2560, %v2559
        %v2562 = vperm.slane %v2161, %v354
        %v2563 = vperm.slane %v2164, %v356
        %v2564 = vsel %vm358, %v2563, %v2562
        %v2565 = vperm.slane %v2167, %v360
        %v2566 = vsel %vm362, %v2565, %v2564
        %v2567 = vperm.slane %v2170, %v364
        %v2568 = vsel %vm366, %v2567, %v2566
        %v2569 = vperm.slane %v2173, %v354
        %v2570 = vperm.slane %v2176, %v356
        %v2571 = vsel %vm358, %v2570, %v2569
        %v2572 = vperm.slane %v2179, %v360
        %v2573 = vsel %vm362, %v2572, %v2571
        %v2574 = vperm.slane %v2182, %v364
        %v2575 = vsel %vm366, %v2574, %v2573
        %v2576 = vperm.slane %v2185, %v354
        %v2577 = vperm.slane %v2188, %v356
        %v2578 = vsel %vm358, %v2577, %v2576
        %v2579 = vperm.slane %v2191, %v360
        %v2580 = vsel %vm362, %v2579, %v2578
        %v2581 = vperm.slane %v2194, %v364
        %v2582 = vsel %vm366, %v2581, %v2580
        %v2583 = vsel %vm417, %v2540, %v2533
        %v2584 = vsel %vm419, %v2547, %v2583
        %v2585 = vsel %vm421, %v2554, %v2584
        %v2586 = vsel %vm423, %v2561, %v2585
        %v2587 = vsel %vm425, %v2568, %v2586
        %v2588 = vsel %vm427, %v2575, %v2587
        %v2589 = vsel %vm429, %v2582, %v2588
        %v2591 = vsel %vm2294, %v2589, -inf
        %v2592 = vsel %vm224, %v2591, -inf
        %2593 = vmax.xlane.f32.xlu0 %v2592
        %v2594 = vpop.xlane.xlu0 %2593
        %v2627 = vperm.slane %v2197, %v354
        %v2628 = vperm.slane %v2200, %v356
        %v2629 = vsel %vm358, %v2628, %v2627
        %v2630 = vperm.slane %v2203, %v360
        %v2631 = vsel %vm362, %v2630, %v2629
        %v2632 = vperm.slane %v2206, %v364
        %v2633 = vsel %vm366, %v2632, %v2631
        %v2634 = vperm.slane %v2209, %v354
        %v2635 = vperm.slane %v2212, %v356
        %v2636 = vsel %vm358, %v2635, %v2634
        %v2637 = vperm.slane %v2215, %v360
        %v2638 = vsel %vm362, %v2637, %v2636
        %v2639 = vperm.slane %v2218, %v364
        %v2640 = vsel %vm366, %v2639, %v2638
        %v2641 = vperm.slane %v2221, %v354
        %v2642 = vperm.slane %v2224, %v356
        %v2643 = vsel %vm358, %v2642, %v2641
        %v2644 = vperm.slane %v2227, %v360
        %v2645 = vsel %vm362, %v2644, %v2643
        %v2646 = vperm.slane %v2230, %v364
        %v2647 = vsel %vm366, %v2646, %v2645
        %v2648 = vperm.slane %v2233, %v354
        %v2649 = vperm.slane %v2236, %v356
        %v2650 = vsel %vm358, %v2649, %v2648
        %v2651 = vperm.slane %v2239, %v360
        %v2652 = vsel %vm362, %v2651, %v2650
        %v2653 = vperm.slane %v2242, %v364
        %v2654 = vsel %vm366, %v2653, %v2652
        %v2655 = vperm.slane %v2245, %v354
        %v2656 = vperm.slane %v2248, %v356
        %v2657 = vsel %vm358, %v2656, %v2655
        %v2658 = vperm.slane %v2251, %v360
        %v2659 = vsel %vm362, %v2658, %v2657
        %v2660 = vperm.slane %v2254, %v364
        %v2661 = vsel %vm366, %v2660, %v2659
        %v2662 = vperm.slane %v2257, %v354
        %v2663 = vperm.slane %v2260, %v356
        %v2664 = vsel %vm358, %v2663, %v2662
        %v2665 = vperm.slane %v2263, %v360
        %v2666 = vsel %vm362, %v2665, %v2664
        %v2667 = vperm.slane %v2266, %v364
        %v2668 = vsel %vm366, %v2667, %v2666
        %v2669 = vperm.slane %v2269, %v354
        %v2670 = vperm.slane %v2272, %v356
        %v2671 = vsel %vm358, %v2670, %v2669
        %v2672 = vperm.slane %v2275, %v360
        %v2673 = vsel %vm362, %v2672, %v2671
        %v2674 = vperm.slane %v2278, %v364
        %v2675 = vsel %vm366, %v2674, %v2673
        %v2676 = vperm.slane %v2281, %v354
        %v2677 = vperm.slane %v2284, %v356
        %v2678 = vsel %vm358, %v2677, %v2676
        %v2679 = vperm.slane %v2287, %v360
        %v2680 = vsel %vm362, %v2679, %v2678
        %v2681 = vperm.slane %v2290, %v364
        %v2682 = vsel %vm366, %v2681, %v2680
        %v2683 = vsel %vm417, %v2640, %v2633
        %v2684 = vsel %vm419, %v2647, %v2683
        %v2685 = vsel %vm421, %v2654, %v2684
        %v2686 = vsel %vm423, %v2661, %v2685
        %v2687 = vsel %vm425, %v2668, %v2686
        %v2688 = vsel %vm427, %v2675, %v2687
        %v2689 = vsel %vm429, %v2682, %v2688
        %v2691 = vsel %vm2294, %v2689, -inf
        %v2692 = vsel %vm224, %v2691, -inf
        %2693 = vmax.xlane.f32.xlu0 %v2692
        %v2694 = vpop.xlane.xlu0 %2693
        %vm2695 = vcmp.ge.s32.totalorder %v666, 8
        %vm2696 = vmand %vm2695, %vm1062
        %v2697 = vsel %vm2696, 1, 0
        %vm2698 = vcmp.eq.s32.totalorder %v2697, 1
        %v2699 = vsel %vm2698, %v2389, -inf
        %v2700 = vsel %vm224, %v2699, -inf
        %2701 = vmax.xlane.f32.xlu0 %v2700
        %v2702 = vpop.xlane.xlu0 %2701
        %v2703 = vsel %vm2698, %v2489, -inf
        %v2704 = vsel %vm224, %v2703, -inf
        %2705 = vmax.xlane.f32.xlu0 %v2704
        %v2706 = vpop.xlane.xlu0 %2705
        %v2707 = vsel %vm2698, %v2589, -inf
        %v2708 = vsel %vm224, %v2707, -inf
        %2709 = vmax.xlane.f32.xlu0 %v2708
        %v2710 = vpop.xlane.xlu0 %2709
        %v2711 = vsel %vm2698, %v2689, -inf
        %v2712 = vsel %vm224, %v2711, -inf
        %2713 = vmax.xlane.f32.xlu0 %v2712
        %v2714 = vpop.xlane.xlu0 %2713
        %vm2715 = vcmp.lt.s32.totalorder %v666, 24
        %vm2716 = vmand %vm1266, %vm2715
        %v2717 = vsel %vm2716, 1, 0
        %vm2718 = vcmp.eq.s32.totalorder %v2717, 1
        %v2719 = vsel %vm2718, %v2389, -inf
        %v2720 = vsel %vm224, %v2719, -inf
        %2721 = vmax.xlane.f32.xlu0 %v2720
        %v2722 = vpop.xlane.xlu0 %2721
        %v2723 = vsel %vm2718, %v2489, -inf
        %v2724 = vsel %vm224, %v2723, -inf
        %2725 = vmax.xlane.f32.xlu0 %v2724
        %v2726 = vpop.xlane.xlu0 %2725
        %v2727 = vsel %vm2718, %v2589, -inf
        %v2728 = vsel %vm224, %v2727, -inf
        %2729 = vmax.xlane.f32.xlu0 %v2728
        %v2730 = vpop.xlane.xlu0 %2729
        %v2731 = vsel %vm2718, %v2689, -inf
        %v2732 = vsel %vm224, %v2731, -inf
        %2733 = vmax.xlane.f32.xlu0 %v2732
        %v2734 = vpop.xlane.xlu0 %2733
        %vm2735 = vcmp.ge.s32.totalorder %v666, 24
        %vm2736 = vmand %vm2735, %vm764
        %v2737 = vsel %vm2736, 1, 0
        %vm2738 = vcmp.eq.s32.totalorder %v2737, 1
        %v2739 = vsel %vm2738, %v2389, -inf
        %v2740 = vsel %vm224, %v2739, -inf
        %2741 = vmax.xlane.f32.xlu0 %v2740
        %v2742 = vpop.xlane.xlu0 %2741
        %v2743 = vsel %vm2738, %v2489, -inf
        %v2744 = vsel %vm224, %v2743, -inf
        %2745 = vmax.xlane.f32.xlu0 %v2744
        %v2746 = vpop.xlane.xlu0 %2745
        %v2747 = vsel %vm2738, %v2589, -inf
        %v2748 = vsel %vm224, %v2747, -inf
        %2749 = vmax.xlane.f32.xlu0 %v2748
        %v2750 = vpop.xlane.xlu0 %2749
        %v2751 = vsel %vm2738, %v2689, -inf
        %v2752 = vsel %vm224, %v2751, -inf
        %2753 = vmax.xlane.f32.xlu0 %v2752
        %v2754 = vpop.xlane.xlu0 %2753
        %v2755 = vsel %vm662, %v867, %v1165
        %vm2756 = vcmask 15360
        %v2757 = vsel %vm2756, %v2755, %v1265
        %vm2758 = vcmask 23552
        %v2759 = vsel %vm2758, %v2757, %v1273
        %vm2760 = vcmask 31744
        %v2761 = vsel %vm2760, %v2759, %v1277
        %vm2762 = vcmask 39936
        %v2763 = vsel %vm2762, %v2761, %v1672
        %vm2764 = vcmask 48128
        %v2765 = vsel %vm2764, %v2763, %v1772
        %vm2766 = vcmask 56320
        %v2767 = vsel %vm2766, %v2765, %v1872
        %v2768 = vsel %vm1906, %v2767, %v1881
        %vm2769 = vcmask 72704
        %v2770 = vsel %vm2769, %v2768, %v1885
        %vm2771 = vcmask 80896
        %v2772 = vsel %vm2771, %v2770, %v1889
        %v2773 = vsel %vm1278, %v2772, %v1897
        %vm2774 = vcmask 97280
        %v2775 = vsel %vm2774, %v2773, %v1901
        %vm2776 = vcmask 105472
        %v2777 = vsel %vm2776, %v2775, %v1905
        %vm2778 = vcmask 113664
        %v2779 = vsel %vm2778, %v2777, %v2394
        %vm2780 = vcmask 121856
        %v2781 = vsel %vm2780, %v2779, %v2494
        %v2782 = vsel %vm662, %v2594, %v2694
        %v2783 = vsel %vm2756, %v2782, %v2702
        %v2784 = vsel %vm2758, %v2783, %v2706
        %v2785 = vsel %vm2760, %v2784, %v2710
        %v2786 = vsel %vm2762, %v2785, %v2714
        %v2787 = vsel %vm2764, %v2786, %v2722
        %v2788 = vsel %vm2766, %v2787, %v2726
        %v2789 = vsel %vm1906, %v2788, %v2730
        %v2790 = vsel %vm2769, %v2789, %v2734
        %v2791 = vsel %vm2771, %v2790, %v2742
        %v2792 = vsel %vm1278, %v2791, %v2746
        %v2793 = vsel %vm2774, %v2792, %v2750
        %v2794 = vsel %vm2776, %v2793, %v2754
        %2796 = vrot.lane.b32.xlu0 %v2794, 16
        %v2797 = vpop.permute.xlu0 %2796
        %v2799 = vsel %vm868, %v2781, %v2797
        %p2800 = scmp.eq.s32.totalorder %s25, 0
        // Predicated region
        $region29: #{tpu_custom_call.1} parent=23 // pred_check
          %p2801 = pneg %p2800
        $region30: #{tpu_custom_call.1} parent=23 // pred_check_branch
          %2803 = sbr.rel (%p2801) target = $region32
        $region31: #{tpu_custom_call.1} parent=23 // pred_region
          %2804 = vst.msk [vmem:[%s191] sm:$0xff] %vm2756, %v663
          %vm2805 = vcmask 244736
          %2806 = vst.msk [vmem:[%s186] sm:$0xff] %vm2805, %v2799
        $region32: #{tpu_custom_call.1} parent=23 // pred_fallthru
          _
        %p2807 = scmp.gt.s32.totalorder %s25, 0
        // Predicated region
        $region33: #{tpu_custom_call.1} parent=23 // pred_check
          %p2808 = pneg %p2807
        $region34: #{tpu_custom_call.1} parent=23 // pred_check_branch
          %2810 = sbr.rel (%p2808) target = $region36
        $region35: #{tpu_custom_call.1} parent=23 // pred_region
          %v2811 = vld [vmem:[%s191] sm:$0xff]
          %v2812 = vadd.f32 %v2811, %v663
          %2813 = vst.msk [vmem:[%s191] sm:$0xff] %vm2756, %v2812
          %v2814 = vld [vmem:[%s186] sm:$0xff]
          %v2815 = vmax.f32 %v2814, %v2799
          %vm2816 = vcmask 244736
          %2817 = vst.msk [vmem:[%s186] sm:$0xff] %vm2816, %v2815
        $region36: #{tpu_custom_call.1} parent=23 // pred_fallthru
          _
        %p2818 = scmp.lt.s32.totalorder %s24, 1
        %s2819 = scalar_select %p2818, %s24, 1
        %s2820 = smul.addr %s2819, 8
        %s2821 = scalar_lea.vmem %s1, %s2820
        %s2822 = sand.u32 %s94, 1
        %s2823 = scalar_lea.sflag [#allocation4], %s2822
        %s2824 = sand.u32 %s94, 1
        %s2825 = smul.addr %s2824, 8
        %s2826 = scalar_lea.vmem [#allocation5], %s2825
        // Predicated region
        $region37: #{tpu_custom_call.1} parent=23 // pred_check
          %p2827 = pneg %p78
        $region38: #{tpu_custom_call.1} parent=23 // pred_check_branch
          %2829 = sbr.rel (%p2827) target = $region40
        $region39: #{tpu_custom_call.1} parent=23 // pred_region
          _
        $region40: #{tpu_custom_call.1} parent=23 // pred_fallthru
          _
        // Predicated region
        $region41: #{tpu_custom_call.1} parent=23 // pred_check
          %p2830 = pneg %p104
        $region42: #{tpu_custom_call.1} parent=23 // pred_check_branch
          %2832 = sbr.rel (%p2830) target = $region44
        $region43: #{tpu_custom_call.1} parent=23 // pred_region
          %2834 = vsyncadd %s2823, 0
          %s2835 = smul.addr %s24, 8
          %s2836 = scalar_lea.hbm %s2, %s2835
          %s2838 = sshll.u32 %s2826, 4
          %s2839 = int_to_ptr.vmem [resolvable:$true] %s2838
          %s2840 = sshll.u32 %s2836, 4
          %s2841 = int_to_ptr.hbm [resolvable:$true] %s2840
          %2843 = dma.vmem_to_hbm [thread:$0]  %s2839, 128, %s2841, %s2823
        $region44: #{tpu_custom_call.1} parent=23 // pred_fallthru
          _
      $region24: #{tpu_custom_call.1} parent=5 // pred_fallthru
        _
      %p2844 = scmp.le.s32.totalorder 2, %s15
      // Predicated region
      $region45: #{tpu_custom_call.1} parent=5 // pred_check
        %p2845 = pneg %p2844
      $region46: #{tpu_custom_call.1} parent=5 // pred_check_branch
        %2847 = sbr.rel (%p2845) target = $region48
      $region47: #{tpu_custom_call.1} parent=5 // pred_region
        %s2848 = ssub.s32 %s15, 2
        // Predicated region
        $region49: #{tpu_custom_call.1} parent=47 // pred_check
          %p2849 = pneg %p84
        $region50: #{tpu_custom_call.1} parent=47 // pred_check_branch
          %2851 = sbr.rel (%p2849) target = $region52
        $region51: #{tpu_custom_call.1} parent=47 // pred_region
          %p2852 = scmp.lt.s32.totalorder %s26, 1
          %s2853 = scalar_select %p2852, %s26, 1
          %s2854 = smul.addr %s2853, 8
          %s2855 = scalar_lea.vmem %s1, %s2854
        $region52: #{tpu_custom_call.1} parent=47 // pred_fallthru
          _
        // Predicated region
        $region53: #{tpu_custom_call.1} parent=47 // pred_check
          %p2856 = pneg %p110
        $region54: #{tpu_custom_call.1} parent=47 // pred_check_branch
          %2858 = sbr.rel (%p2856) target = $region56
        $region55: #{tpu_custom_call.1} parent=47 // pred_region
          %s2859 = sand.u32 %s95, 1
          %s2860 = scalar_lea.sflag [#allocation4], %s2859
          %s2861 = sand.u32 %s95, 1
          %s2862 = smul.addr %s2861, 8
          %s2863 = scalar_lea.vmem [#allocation5], %s2862
          %2865 = dma.done %s2860, 128
        $region56: #{tpu_custom_call.1} parent=47 // pred_fallthru
          _
      $region48: #{tpu_custom_call.1} parent=5 // pred_fallthru
        _
    $region6: #{tpu_custom_call.1} parent=1 // loop_footer
      %s19 = sadd.s32 1, %s15
    $region7: #{tpu_custom_call.1} parent=1 // loop_footer_branch
      %14 = sbr.rel target = $region3
    $region8: #{tpu_custom_call.1} parent=1 // loop_exit
      _
    %2866 = vsyncpa [#allocation3], 1
    %s2867 = scalar_lea.sflag [#allocation3], 1
    %2868 = vsyncpa %s2867, 1
    %2869 = vsyncpa [#allocation4], 1
    %s2870 = scalar_lea.sflag [#allocation4], 1
    %2871 = vsyncpa %s2870, 1

</llo_original>
